<compile_context>
chip_gen: v7x
topology: tpu7x:2x2x1
jax: 0.10.0
libtpu: 0.0.40
codegen_flags: <defaults>
</compile_context>

<pallas_src>
import jax
import jax.numpy as jnp
from jax.experimental import pallas as pl
from jax.experimental.pallas import tpu as pltpu


def _round_up(x, m):
    return (x + m - 1) // m * m


def _hw_config():
    """Per-generation lane-tile cap & VMEM budget (v7x has 64 MiB VMEM/TC)."""
    max_tile, vmem_limit = 4096, 48 * 1024 * 1024          # safe for v7x
    try:
        info = pltpu.get_tpu_info()
        if getattr(info, "vmem_capacity_bytes", 0) >= 128 * 1024 * 1024:
            max_tile, vmem_limit = 8192, 64 * 1024 * 1024  # v5e / v6e
    except Exception:
        pass
    return max_tile, vmem_limit


_MAX_TILE, _VMEM_LIMIT = _hw_config()

_COMPILER_PARAMS = pltpu.CompilerParams(
    dimension_semantics=("parallel",),
    vmem_limit_bytes=_VMEM_LIMIT,
)


def _pick_tile(m, max_tile):
    """128-aligned lane tile for an axis of length m.  When the whole axis
    would fit a single tile, split it so there are >=2 grid tiles and the
    "parallel" grid axis can be sharded across v7x's two TensorCores."""
    mt = min(max_tile, _round_up(m, 128))
    if _round_up(m, mt) == mt and mt >= 256:
        mt = _round_up((mt + 1) // 2, 128)
    m_pad = _round_up(m, mt)
    return mt, m_pad, m_pad // mt


# ---------------------------------------------------------------------------
# Pallas kernels
# ---------------------------------------------------------------------------
def _conv_pool_relu_kernel(p_ref, w_ref, o_ref):
    # p_ref: (4, K+1, MT) bf16 -- 4 pool-window im2col groups, ones bias row.
    # w_ref: (Cout, K+1) bf16 with the bias folded in as the last K column.
    # o_ref: (Cout, MT) bf16 -- relu(maxpool(conv + b)), lane-dense store.
    w = w_ref[...]
    z0 = jnp.dot(w, p_ref[0], preferred_element_type=jnp.float32)
    z1 = jnp.dot(w, p_ref[1], preferred_element_type=jnp.float32)
    z2 = jnp.dot(w, p_ref[2], preferred_element_type=jnp.float32)
    z3 = jnp.dot(w, p_ref[3], preferred_element_type=jnp.float32)
    zp = jnp.maximum(jnp.maximum(z0, z1), jnp.maximum(z2, z3))
    o_ref[...] = jnp.maximum(zp, 0.0).astype(o_ref.dtype)


def _mlp_head_kernel(x_ref, w1_ref, w2_ref, o_ref):
    # x_ref: (321, NT) bf16 (320 features + ones row); w1: (50, 321) bf16 with
    # bias column; w2: (10, 51) bf16 with bias column; o_ref: (10, NT) f32
    # log-probs -- classes on sublanes, batch on lanes.
    h = jnp.dot(w1_ref[...], x_ref[...], preferred_element_type=jnp.float32)
    h = jnp.maximum(h, 0.0).astype(w2_ref.dtype)
    # TODO(synk): Dropout2d / F.dropout are identity here (eval-mode
    # semantics); PyTorch train-mode dropout has no reproducible equivalent.
    w2 = w2_ref[...]
    d_h = w2.shape[1] - 1
    logits = (jnp.dot(w2[:, :d_h], h, preferred_element_type=jnp.float32)
              + w2[:, d_h:].astype(jnp.float32))
    m = jnp.max(logits, axis=0, keepdims=True)
    s = logits - m
    lse = jnp.log(jnp.sum(jnp.exp(s), axis=0, keepdims=True))
    o_ref[...] = s - lse  # log_softmax over the class axis


# ---------------------------------------------------------------------------
# pallas_call wrappers
# ---------------------------------------------------------------------------
def conv_pool_relu(pt, w_ext, *, cout, mt, num_tiles):
    g, k1, _ = pt.shape
    flops = 2 * cout * k1 * g * mt * num_tiles
    bytes_accessed = pt.size * 2 + w_ext.size * 2 + cout * mt * num_tiles * 2
    return pl.pallas_call(
        _conv_pool_relu_kernel,
        out_shape=jax.ShapeDtypeStruct((cout, num_tiles * mt), jnp.bfloat16),
        grid=(num_tiles,),
        in_specs=[
            pl.BlockSpec((g, k1, mt), lambda j: (0, 0, j)),
            pl.BlockSpec((cout, k1), lambda j: (0, 0)),    # weights+bias resident
        ],
        out_specs=pl.BlockSpec((cout, mt), lambda j: (0, j)),
        compiler_params=_COMPILER_PARAMS,
        cost_estimate=pl.CostEstimate(flops=flops, transcendentals=0,
                                      bytes_accessed=bytes_accessed),
    )(pt, w_ext)


def mlp_head(x_t, w1_ext, w2_ext, *, nt, num_tiles):
    d_in1 = x_t.shape[0]
    d_h, d_out = w1_ext.shape[0], w2_ext.shape[0]
    flops = 2 * (d_h * d_in1 + d_out * d_h) * nt * num_tiles
    bytes_accessed = (x_t.size * 2 + (w1_ext.size + w2_ext.size) * 2
                      + d_out * nt * num_tiles * 4)
    return pl.pallas_call(
        _mlp_head_kernel,
        out_shape=jax.ShapeDtypeStruct((d_out, num_tiles * nt), jnp.float32),
        grid=(num_tiles,),
        in_specs=[
            pl.BlockSpec((d_in1, nt), lambda j: (0, j)),
            pl.BlockSpec((d_h, d_in1), lambda j: (0, 0)),
            pl.BlockSpec((d_out, d_h + 1), lambda j: (0, 0)),
        ],
        out_specs=pl.BlockSpec((d_out, nt), lambda j: (0, j)),
        compiler_params=_COMPILER_PARAMS,
        cost_estimate=pl.CostEstimate(flops=flops,
                                      transcendentals=2 * d_out * nt * num_tiles,
                                      bytes_accessed=bytes_accessed),
    )(x_t, w1_ext, w2_ext)


# ---------------------------------------------------------------------------
# Glue (pure indexing / reshape / pad) in plain JAX
# ---------------------------------------------------------------------------
def _im2col_pool_groups(x_cnhw, *, k=5, pool=2, max_tile):
    """Pool-grouped, transposed im2col over channel-major (C, N, H, W) input.

    Returns pt of shape (pool*pool, C*k*k + 1, M_pad) bf16: group-major, with a
    trailing all-ones K row so the conv bias folds into the matmul.  The lane
    axis is the pooled-output-position axis (n, hp, wp) padded to a multiple of
    the 128-aligned tile mt.  No per-tile interleave transpose is needed -- the
    BlockSpec slices the last axis directly."""
    c, n, h, w = x_cnhw.shape
    ho, wo = h - k + 1, w - k + 1
    hp, wp = ho // pool, wo // pool
    m = n * hp * wp
    mt, m_pad, num_tiles = _pick_tile(m, max_tile)

    xb = x_cnhw.astype(jnp.bfloat16)
    taps = jnp.stack([xb[:, :, di:di + ho, dj:dj + wo]
                      for di in range(k) for dj in range(k)], axis=1)
    # (C, k*k, N, Ho, Wo) -> split the 2x2 pooling windows
    taps = taps.reshape(c, k * k, n, hp, pool, wp, pool)
    # -> (pool_a, pool_b, c, kk, n, hp, wp); K order (c, di, dj) matches
    #    torch_weight.reshape(Cout, C*k*k)
    pt = jnp.transpose(taps, (4, 6, 0, 1, 2, 3, 5))
    pt = pt.reshape(pool * pool, c * k * k, m)
    ones = jnp.ones((pool * pool, 1, m), jnp.bfloat16)      # bias row
    pt = jnp.concatenate([pt, ones], axis=1)
    pt = jnp.pad(pt, ((0, 0), (0, 0), (0, m_pad - m)))
    return pt, (n, hp, wp, m, mt, num_tiles)


def _conv_pool_relu_layer(x_cnhw, w_oihw, b):
    """conv(k=5, VALID) -> maxpool(2) -> relu, channel-major in & out."""
    cout = w_oihw.shape[0]
    pt, (n, hp, wp, m, mt, num_tiles) = _im2col_pool_groups(
        x_cnhw, max_tile=_MAX_TILE)
    w_ext = jnp.concatenate([w_oihw.reshape(cout, -1), b.reshape(cout, 1)],
                            axis=1).astype(jnp.bfloat16)     # bias folded in
    y = conv_pool_relu(pt, w_ext, cout=cout, mt=mt, num_tiles=num_tiles)
    return y[:, :m].reshape(cout, n, hp, wp)                 # (Cout,N,Hp,Wp) bf16


def init_params(key):
    ks = jax.random.split(key, 8)
    s = lambda k, shape, fan_in: (jax.random.normal(k, shape, jnp.float32)
                                  * (1.0 / jnp.sqrt(fan_in)))
    return {
        "conv1_w": s(ks[0], (10, 1, 5, 5), 1 * 25),
        "conv1_b": s(ks[1], (10,), 1 * 25),
        "conv2_w": s(ks[2], (20, 10, 5, 5), 10 * 25),
        "conv2_b": s(ks[3], (20,), 10 * 25),
        "fc1_w":   s(ks[4], (50, 320), 320),
        "fc1_b":   s(ks[5], (50,), 320),
        "fc2_w":   s(ks[6], (10, 50), 50),
        "fc2_b":   s(ks[7], (10,), 50),
    }


def net1_forward(x_nchw, params):
    # Channel-major activations avoid NCHW<->CNHW transposes between layers.
    x = jnp.transpose(x_nchw.astype(jnp.float32), (1, 0, 2, 3))   # (1,N,28,28)

    # conv1 -> maxpool(2) -> relu ; conv2 -> (Dropout2d: id) -> maxpool -> relu
    y1 = _conv_pool_relu_layer(x, params["conv1_w"], params["conv1_b"])
    y2 = _conv_pool_relu_layer(y1, params["conv2_w"], params["conv2_b"])

    # flatten in torch's per-image (C,H,W) order with batch on lanes: (320, N)
    c2, n, hp, wp = y2.shape
    x_t = jnp.transpose(y2, (0, 2, 3, 1)).reshape(c2 * hp * wp, n)

    nt, n_pad, num_tiles = _pick_tile(n, _MAX_TILE)
    x_t = jnp.concatenate([x_t, jnp.ones((1, n), jnp.bfloat16)], axis=0)
    x_t = jnp.pad(x_t, ((0, 0), (0, n_pad - n)))                  # (321, n_pad)

    w1_ext = jnp.concatenate([params["fc1_w"], params["fc1_b"].reshape(-1, 1)],
                             axis=1).astype(jnp.bfloat16)         # (50, 321)
    w2_ext = jnp.concatenate([params["fc2_w"], params["fc2_b"].reshape(-1, 1)],
                             axis=1).astype(jnp.bfloat16)         # (10, 51)

    logits_t = mlp_head(x_t, w1_ext, w2_ext, nt=nt, num_tiles=num_tiles)
    return logits_t[:, :n].T                                      # (N, 10) log-probs


# ---------------------------------------------------------------------------
# Pure-XLA reference (same bf16 rounding of matmul inputs as the kernels)
# ---------------------------------------------------------------------------
def _bf16_round(a):
    return a.astype(jnp.bfloat16).astype(jnp.float32)


def reference_forward(x, params):
    dn = ("NCHW", "OIHW", "NCHW")

    def conv_block(inp, w, b):
        c = jax.lax.conv_general_dilated(_bf16_round(inp), _bf16_round(w),
                                         (1, 1), "VALID", dimension_numbers=dn)
        c = c + b[None, :, None, None]
        p = jax.lax.reduce_window(c, -jnp.inf, jax.lax.max,
                                  (1, 1, 2, 2), (1, 1, 2, 2), "VALID")
        return jnp.maximum(p, 0.0)

    y = conv_block(x.astype(jnp.float32), params["conv1_w"], params["conv1_b"])
    y = conv_block(y, params["conv2_w"], params["conv2_b"])
    flat = y.reshape(y.shape[0], 320)
    h = jnp.maximum(_bf16_round(flat) @ _bf16_round(params["fc1_w"]).T
                    + params["fc1_b"], 0.0)
    logits = _bf16_round(h) @ _bf16_round(params["fc2_w"]).T + params["fc2_b"]
    return jax.nn.log_softmax(logits, axis=-1)


if __name__ == "__main__":
    key = jax.random.PRNGKey(0)
    k_x, k_p = jax.random.split(key)
    # Net1 requires 28x28 single-channel input so the flatten is 20*4*4 = 320.
    x = jax.random.normal(k_x, (2, 1, 28, 28), jnp.float32)
    params = init_params(k_p)

    out = jax.jit(net1_forward)(x, params)
    out = jax.block_until_ready(out)

    assert out.shape == (2, 10), out.shape
    assert bool(jnp.all(jnp.isfinite(out)))
    # log_softmax rows must (log-)sum to ~0
    row_lse = jax.scipy.special.logsumexp(out, axis=-1)
    assert bool(jnp.all(jnp.abs(row_lse) < 1e-4)), row_lse
    # match the XLA reference (bf16-rounded matmul inputs, f32 accumulation)
    ref = reference_forward(x, params)
    assert bool(jnp.allclose(out, ref, atol=2e-2, rtol=2e-2))
    print("KERNEL_OK")
</pallas_src>

<mosaic_0001>
module attributes {stable_mosaic.version = 11 : i64} {
  func.func @_conv_pool_relu_kernel(%arg0: i32, %arg1: memref<4x26x256xbf16, #tpu.memory_space<vmem>>, %arg2: memref<10x26xbf16, #tpu.memory_space<vmem>>, %arg3: memref<10x256xbf16, #tpu.memory_space<vmem>>) attributes {dimension_semantics = [#tpu.dimension_semantics<parallel>], iteration_bounds = array<i64: 2>, scalar_prefetch = 0 : i64, scratch_operands = 0 : i64, tpu.core_type = #tpu.core_type<tc>, window_params = [{transform_indices = @transform_0, window_bounds = array<i64: 4, 26, 256>}, {pipeline_mode = #tpu.pipeline_mode<synchronous>, transform_indices = @transform_1, window_bounds = array<i64: 10, 26>}, {transform_indices = @transform_2, window_bounds = array<i64: 10, 256>}]} {
    %c0 = arith.constant 0 : index
    %c0_0 = arith.constant 0 : index
    %0 = vector.load %arg2[%c0, %c0_0] : memref<10x26xbf16, #tpu.memory_space<vmem>>, vector<10x26xbf16>
    %c0_1 = arith.constant 0 : index
    %c0_2 = arith.constant 0 : index
    %c0_3 = arith.constant 0 : index
    %1 = vector.load %arg1[%c0_1, %c0_2, %c0_3] : memref<4x26x256xbf16, #tpu.memory_space<vmem>>, vector<1x26x256xbf16>
    %2 = vector.shape_cast %1 : vector<1x26x256xbf16> to vector<26x256xbf16>
    %cst = arith.constant dense<0.000000e+00> : vector<10x256xf32>
    %3 = tpu.matmul %0, %2, %cst {dimension_numbers = #tpu.dot_dimension_numbers<[1], [0], [0], [1], [0, 0, 1, 1], [], []>} : vector<10x26xbf16>, vector<26x256xbf16>, vector<10x256xf32> -> vector<10x256xf32>
    %c1 = arith.constant 1 : index
    %c0_4 = arith.constant 0 : index
    %c0_5 = arith.constant 0 : index
    %4 = vector.load %arg1[%c1, %c0_4, %c0_5] : memref<4x26x256xbf16, #tpu.memory_space<vmem>>, vector<1x26x256xbf16>
    %5 = vector.shape_cast %4 : vector<1x26x256xbf16> to vector<26x256xbf16>
    %cst_6 = arith.constant dense<0.000000e+00> : vector<10x256xf32>
    %6 = tpu.matmul %0, %5, %cst_6 {dimension_numbers = #tpu.dot_dimension_numbers<[1], [0], [0], [1], [0, 0, 1, 1], [], []>} : vector<10x26xbf16>, vector<26x256xbf16>, vector<10x256xf32> -> vector<10x256xf32>
    %c2 = arith.constant 2 : index
    %c0_7 = arith.constant 0 : index
    %c0_8 = arith.constant 0 : index
    %7 = vector.load %arg1[%c2, %c0_7, %c0_8] : memref<4x26x256xbf16, #tpu.memory_space<vmem>>, vector<1x26x256xbf16>
    %8 = vector.shape_cast %7 : vector<1x26x256xbf16> to vector<26x256xbf16>
    %cst_9 = arith.constant dense<0.000000e+00> : vector<10x256xf32>
    %9 = tpu.matmul %0, %8, %cst_9 {dimension_numbers = #tpu.dot_dimension_numbers<[1], [0], [0], [1], [0, 0, 1, 1], [], []>} : vector<10x26xbf16>, vector<26x256xbf16>, vector<10x256xf32> -> vector<10x256xf32>
    %c3 = arith.constant 3 : index
    %c0_10 = arith.constant 0 : index
    %c0_11 = arith.constant 0 : index
    %10 = vector.load %arg1[%c3, %c0_10, %c0_11] : memref<4x26x256xbf16, #tpu.memory_space<vmem>>, vector<1x26x256xbf16>
    %11 = vector.shape_cast %10 : vector<1x26x256xbf16> to vector<26x256xbf16>
    %cst_12 = arith.constant dense<0.000000e+00> : vector<10x256xf32>
    %12 = tpu.matmul %0, %11, %cst_12 {dimension_numbers = #tpu.dot_dimension_numbers<[1], [0], [0], [1], [0, 0, 1, 1], [], []>} : vector<10x26xbf16>, vector<26x256xbf16>, vector<10x256xf32> -> vector<10x256xf32>
    %13 = arith.maximumf %3, %6 : vector<10x256xf32>
    %14 = arith.maximumf %9, %12 : vector<10x256xf32>
    %15 = arith.maximumf %13, %14 : vector<10x256xf32>
    %cst_13 = arith.constant 0.000000e+00 : f32
    %16 = vector.broadcast %cst_13 : f32 to vector<10x256xf32>
    %17 = arith.maximumf %15, %16 : vector<10x256xf32>
    %18 = arith.truncf %17 : vector<10x256xf32> to vector<10x256xbf16>
    %c0_14 = arith.constant 0 : index
    %c0_15 = arith.constant 0 : index
    %19 = vector.load %arg3[%c0_14, %c0_15] : memref<10x256xbf16, #tpu.memory_space<vmem>>, vector<10x256xbf16>
    tpu.vector_store %arg3[%c0_14, %c0_15], %18 {strides = array<i32>} : memref<10x256xbf16, #tpu.memory_space<vmem>>, vector<10x256xbf16>,
    return
  }
  func.func @transform_0(%arg0: i32) -> (i32, i32, i32) {
    %c0_i32 = arith.constant 0 : i32
    %c0_i32_0 = arith.constant 0 : i32
    %c0_i32_1 = arith.constant 0 : i32
    return %c0_i32, %c0_i32_0, %arg0 : i32, i32, i32
  }
  func.func @transform_1(%arg0: i32) -> (i32, i32) {
    %c0_i32 = arith.constant 0 : i32
    %c0_i32_0 = arith.constant 0 : i32
    %c0_i32_1 = arith.constant 0 : i32
    return %c0_i32, %c0_i32_0 : i32, i32
  }
  func.func @transform_2(%arg0: i32) -> (i32, i32) {
    %c0_i32 = arith.constant 0 : i32
    %c0_i32_0 = arith.constant 0 : i32
    return %c0_i32, %arg0 : i32, i32
  }
}

module attributes {stable_mosaic.version = 11 : i64} {
  func.func @_conv_pool_relu_kernel(%arg0: i32, %arg1: memref<4x251x128xbf16, #tpu.memory_space<vmem>>, %arg2: memref<20x251xbf16, #tpu.memory_space<vmem>>, %arg3: memref<20x128xbf16, #tpu.memory_space<vmem>>) attributes {dimension_semantics = [#tpu.dimension_semantics<parallel>], iteration_bounds = array<i64: 1>, scalar_prefetch = 0 : i64, scratch_operands = 0 : i64, tpu.core_type = #tpu.core_type<tc>, window_params = [{transform_indices = @transform_0, window_bounds = array<i64: 4, 251, 128>}, {pipeline_mode = #tpu.pipeline_mode<synchronous>, transform_indices = @transform_1, window_bounds = array<i64: 20, 251>}, {transform_indices = @transform_2, window_bounds = array<i64: 20, 128>}]} {
    %c0 = arith.constant 0 : index
    %c0_0 = arith.constant 0 : index
    %0 = vector.load %arg2[%c0, %c0_0] : memref<20x251xbf16, #tpu.memory_space<vmem>>, vector<20x251xbf16>
    %c0_1 = arith.constant 0 : index
    %c0_2 = arith.constant 0 : index
    %c0_3 = arith.constant 0 : index
    %1 = vector.load %arg1[%c0_1, %c0_2, %c0_3] : memref<4x251x128xbf16, #tpu.memory_space<vmem>>, vector<1x251x128xbf16>
    %2 = vector.shape_cast %1 : vector<1x251x128xbf16> to vector<251x128xbf16>
    %cst = arith.constant dense<0.000000e+00> : vector<20x128xf32>
    %3 = tpu.matmul %0, %2, %cst {dimension_numbers = #tpu.dot_dimension_numbers<[1], [0], [0], [1], [0, 0, 1, 1], [], []>} : vector<20x251xbf16>, vector<251x128xbf16>, vector<20x128xf32> -> vector<20x128xf32>
    %c1 = arith.constant 1 : index
    %c0_4 = arith.constant 0 : index
    %c0_5 = arith.constant 0 : index
    %4 = vector.load %arg1[%c1, %c0_4, %c0_5] : memref<4x251x128xbf16, #tpu.memory_space<vmem>>, vector<1x251x128xbf16>
    %5 = vector.shape_cast %4 : vector<1x251x128xbf16> to vector<251x128xbf16>
    %cst_6 = arith.constant dense<0.000000e+00> : vector<20x128xf32>
    %6 = tpu.matmul %0, %5, %cst_6 {dimension_numbers = #tpu.dot_dimension_numbers<[1], [0], [0], [1], [0, 0, 1, 1], [], []>} : vector<20x251xbf16>, vector<251x128xbf16>, vector<20x128xf32> -> vector<20x128xf32>
    %c2 = arith.constant 2 : index
    %c0_7 = arith.constant 0 : index
    %c0_8 = arith.constant 0 : index
    %7 = vector.load %arg1[%c2, %c0_7, %c0_8] : memref<4x251x128xbf16, #tpu.memory_space<vmem>>, vector<1x251x128xbf16>
    %8 = vector.shape_cast %7 : vector<1x251x128xbf16> to vector<251x128xbf16>
    %cst_9 = arith.constant dense<0.000000e+00> : vector<20x128xf32>
    %9 = tpu.matmul %0, %8, %cst_9 {dimension_numbers = #tpu.dot_dimension_numbers<[1], [0], [0], [1], [0, 0, 1, 1], [], []>} : vector<20x251xbf16>, vector<251x128xbf16>, vector<20x128xf32> -> vector<20x128xf32>
    %c3 = arith.constant 3 : index
    %c0_10 = arith.constant 0 : index
    %c0_11 = arith.constant 0 : index
    %10 = vector.load %arg1[%c3, %c0_10, %c0_11] : memref<4x251x128xbf16, #tpu.memory_space<vmem>>, vector<1x251x128xbf16>
    %11 = vector.shape_cast %10 : vector<1x251x128xbf16> to vector<251x128xbf16>
    %cst_12 = arith.constant dense<0.000000e+00> : vector<20x128xf32>
    %12 = tpu.matmul %0, %11, %cst_12 {dimension_numbers = #tpu.dot_dimension_numbers<[1], [0], [0], [1], [0, 0, 1, 1], [], []>} : vector<20x251xbf16>, vector<251x128xbf16>, vector<20x128xf32> -> vector<20x128xf32>
    %13 = arith.maximumf %3, %6 : vector<20x128xf32>
    %14 = arith.maximumf %9, %12 : vector<20x128xf32>
    %15 = arith.maximumf %13, %14 : vector<20x128xf32>
    %cst_13 = arith.constant 0.000000e+00 : f32
    %16 = vector.broadcast %cst_13 : f32 to vector<20x128xf32>
    %17 = arith.maximumf %15, %16 : vector<20x128xf32>
    %18 = arith.truncf %17 : vector<20x128xf32> to vector<20x128xbf16>
    %c0_14 = arith.constant 0 : index
    %c0_15 = arith.constant 0 : index
    %19 = vector.load %arg3[%c0_14, %c0_15] : memref<20x128xbf16, #tpu.memory_space<vmem>>, vector<20x128xbf16>
    tpu.vector_store %arg3[%c0_14, %c0_15], %18 {strides = array<i32>} : memref<20x128xbf16, #tpu.memory_space<vmem>>, vector<20x128xbf16>,
    return
  }
  func.func @transform_0(%arg0: i32) -> (i32, i32, i32) {
    %c0_i32 = arith.constant 0 : i32
    %c0_i32_0 = arith.constant 0 : i32
    %c0_i32_1 = arith.constant 0 : i32
    return %c0_i32, %c0_i32_0, %arg0 : i32, i32, i32
  }
  func.func @transform_1(%arg0: i32) -> (i32, i32) {
    %c0_i32 = arith.constant 0 : i32
    %c0_i32_0 = arith.constant 0 : i32
    %c0_i32_1 = arith.constant 0 : i32
    return %c0_i32, %c0_i32_0 : i32, i32
  }
  func.func @transform_2(%arg0: i32) -> (i32, i32) {
    %c0_i32 = arith.constant 0 : i32
    %c0_i32_0 = arith.constant 0 : i32
    return %c0_i32, %arg0 : i32, i32
  }
}

module attributes {stable_mosaic.version = 11 : i64} {
  func.func @_mlp_head_kernel(%arg0: i32, %arg1: memref<321x128xbf16, #tpu.memory_space<vmem>>, %arg2: memref<50x321xbf16, #tpu.memory_space<vmem>>, %arg3: memref<10x51xbf16, #tpu.memory_space<vmem>>, %arg4: memref<10x128xf32, #tpu.memory_space<vmem>>) attributes {dimension_semantics = [#tpu.dimension_semantics<parallel>], iteration_bounds = array<i64: 1>, scalar_prefetch = 0 : i64, scratch_operands = 0 : i64, tpu.core_type = #tpu.core_type<tc>, window_params = [{transform_indices = @transform_0, window_bounds = array<i64: 321, 128>}, {pipeline_mode = #tpu.pipeline_mode<synchronous>, transform_indices = @transform_1, window_bounds = array<i64: 50, 321>}, {pipeline_mode = #tpu.pipeline_mode<synchronous>, transform_indices = @transform_2, window_bounds = array<i64: 10, 51>}, {transform_indices = @transform_3, window_bounds = array<i64: 10, 128>}]} {
    %c0 = arith.constant 0 : index
    %c0_0 = arith.constant 0 : index
    %0 = vector.load %arg2[%c0, %c0_0] : memref<50x321xbf16, #tpu.memory_space<vmem>>, vector<50x321xbf16>
    %c0_1 = arith.constant 0 : index
    %c0_2 = arith.constant 0 : index
    %1 = vector.load %arg1[%c0_1, %c0_2] : memref<321x128xbf16, #tpu.memory_space<vmem>>, vector<321x128xbf16>
    %cst = arith.constant dense<0.000000e+00> : vector<50x128xf32>
    %2 = tpu.matmul %0, %1, %cst {dimension_numbers = #tpu.dot_dimension_numbers<[1], [0], [0], [1], [0, 0, 1, 1], [], []>} : vector<50x321xbf16>, vector<321x128xbf16>, vector<50x128xf32> -> vector<50x128xf32>
    %cst_3 = arith.constant 0.000000e+00 : f32
    %3 = vector.broadcast %cst_3 : f32 to vector<50x128xf32>
    %4 = arith.maximumf %2, %3 : vector<50x128xf32>
    %5 = arith.truncf %4 : vector<50x128xf32> to vector<50x128xbf16>
    %c0_4 = arith.constant 0 : index
    %c0_5 = arith.constant 0 : index
    %6 = vector.load %arg3[%c0_4, %c0_5] : memref<10x51xbf16, #tpu.memory_space<vmem>>, vector<10x51xbf16>
    %7 = vector.extract_strided_slice %6 {offsets = [0, 0], sizes = [10, 50], strides = [1, 1]} : vector<10x51xbf16> to vector<10x50xbf16>
    %cst_6 = arith.constant dense<0.000000e+00> : vector<10x128xf32>
    %8 = tpu.matmul %7, %5, %cst_6 {dimension_numbers = #tpu.dot_dimension_numbers<[1], [0], [0], [1], [0, 0, 1, 1], [], []>} : vector<10x50xbf16>, vector<50x128xbf16>, vector<10x128xf32> -> vector<10x128xf32>
    %9 = vector.extract_strided_slice %6 {offsets = [0, 50], sizes = [10, 1], strides = [1, 1]} : vector<10x51xbf16> to vector<10x1xbf16>
    %10 = arith.extf %9 : vector<10x1xbf16> to vector<10x1xf32>
    %11 = vector.broadcast %10 : vector<10x1xf32> to vector<10x128xf32>
    %12 = arith.addf %8, %11 : vector<10x128xf32>
    %cst_7 = arith.constant dense<0xFF800000> : vector<128xf32>
    %13 = vector.multi_reduction <maximumf>, %12, %cst_7 [0] : vector<10x128xf32> to vector<128xf32>
    %14 = vector.shape_cast %13 : vector<128xf32> to vector<1x128xf32>
    %15 = vector.broadcast %14 : vector<1x128xf32> to vector<10x128xf32>
    %16 = arith.subf %12, %15 : vector<10x128xf32>
    %17 = math.exp %16 : vector<10x128xf32>
    %cst_8 = arith.constant dense<0.000000e+00> : vector<128xf32>
    %18 = vector.multi_reduction <add>, %17, %cst_8 [0] : vector<10x128xf32> to vector<128xf32>
    %19 = vector.shape_cast %18 : vector<128xf32> to vector<1x128xf32>
    %20 = math.log %19 : vector<1x128xf32>
    %21 = vector.broadcast %20 : vector<1x128xf32> to vector<10x128xf32>
    %22 = arith.subf %16, %21 : vector<10x128xf32>
    %c0_9 = arith.constant 0 : index
    %c0_10 = arith.constant 0 : index
    %23 = vector.load %arg4[%c0_9, %c0_10] : memref<10x128xf32, #tpu.memory_space<vmem>>, vector<10x128xf32>
    tpu.vector_store %arg4[%c0_9, %c0_10], %22 {strides = array<i32>} : memref<10x128xf32, #tpu.memory_space<vmem>>, vector<10x128xf32>,
    return
  }
  func.func @transform_0(%arg0: i32) -> (i32, i32) {
    %c0_i32 = arith.constant 0 : i32
    %c0_i32_0 = arith.constant 0 : i32
    return %c0_i32, %arg0 : i32, i32
  }
  func.func @transform_1(%arg0: i32) -> (i32, i32) {
    %c0_i32 = arith.constant 0 : i32
    %c0_i32_0 = arith.constant 0 : i32
    %c0_i32_1 = arith.constant 0 : i32
    return %c0_i32, %c0_i32_0 : i32, i32
  }
  func.func @transform_2(%arg0: i32) -> (i32, i32) {
    %c0_i32 = arith.constant 0 : i32
    %c0_i32_0 = arith.constant 0 : i32
    %c0_i32_1 = arith.constant 0 : i32
    return %c0_i32, %c0_i32_0 : i32, i32
  }
  func.func @transform_3(%arg0: i32) -> (i32, i32) {
    %c0_i32 = arith.constant 0 : i32
    %c0_i32_0 = arith.constant 0 : i32
    return %c0_i32, %arg0 : i32, i32
  }
}

</mosaic_0001>

<llo_original>
// kernel: net1_forward.3
$region0: #{net1_forward.3}
  #allocation0 [shape = 'u32[]', space=smem, size = 0x4, offset = 0x4, fixed_abs, tag = 'smem constant byte address 0x4 - core index']
  #allocation1 [shape = 'u32[144,128]{1,0:T(1,128)}', space=vmem, size = 0x12000, scoped, tag = 'internal scratch']
  %s0 = inlined_call_operand.vmem [shape: bf16[4,26,512], index: 0, kind: input, shape index: {}]
  %s1 = inlined_call_operand.vmem [shape: bf16[10,26], index: 1, kind: input, shape index: {}]
  %s2 = inlined_call_operand.vmem [shape: bf16[10,512], index: 2, kind: output, shape index: {}]
  %s3 = sld [smem:[#allocation0]]
  $region113: #{net1_forward.3} parent=0
    _
  %s5 = ssub.s32 1, %s3
  %s6 = scalar_select 0, %s5, %s3
  $region1: #{net1_forward.3} parent=0
    #allocation2 [shape = 'u8[131072]{0}', space=vmem, size = 0x20000, scoped, tag = 'input window, operand 0']
    #allocation3 [shape = 'u8[16384]{0}', space=vmem, size = 0x4000, scoped, tag = 'output window, operand 0']
    loop: start=0, step=1, limit=4
    $region2: #{net1_forward.3} parent=1 // loop_pre_header
      _
    $region3: #{net1_forward.3} parent=1 // loop_header
      %s8 = sphi 0, %s12
      %p9 = scmp.ge.s32.totalorder %s8, 4
      %s18 = sphi 0, %s20
      %s21 = sphi 0, %s18
      %s22 = sphi 0, %s21
      %s38 = sphi 0, %s22
      %s42 = sphi 0, %s42
      %s44 = sphi 0, %s42
      %s45 = sphi 0, %s44
      %s59 = sphi 0, %s45
      %s65 = sphi 0, %s67
      %s68 = sphi 0, %s65
      %s69 = sphi 0, %s68
      %s85 = sphi 0, %s69
    $region4: #{net1_forward.3} parent=1 // loop_header_branch
      %11 = sbr.rel (%p9) target = $region8
    $region5: #{net1_forward.3} parent=1 // loop_body
      %s13 = ssub.s32 %s8, 1
      %s14 = ssub.s32 %s8, 2
      %s15 = sadd.s32 %s8, 1
      %s16 = ssub.s32 %s8, %s15
      %p17 = scmp.eq.s32.totalorder %s16, 0
      %s19 = sadd.s32 %s18, 1
      %s20 = scalar_select %p17, %s18, %s19
      %p23 = pneg %p17
      %p24 = scmp.eq.s32.totalorder %s8, 1
      %p25 = por %p23, %p24
      %p26 = scmp.ne.s32.totalorder %s18, %s21
      %p27 = scmp.eq.s32.totalorder %s8, 0
      %p28 = por %p26, %p27
      %p29 = scmp.ne.s32.totalorder %s18, %s21
      %p30 = scmp.eq.s32.totalorder %s13, 1
      %p31 = por %p29, %p30
      %p32 = scmp.ne.s32.totalorder %s21, %s22
      %p33 = scmp.eq.s32.totalorder %s13, 0
      %p34 = por %p32, %p33
      %p35 = scmp.ne.s32.totalorder %s21, %s22
      %p36 = scmp.eq.s32.totalorder %s14, 1
      %p37 = por %p35, %p36
      %p39 = scmp.ne.s32.totalorder %s22, %s38
      %p40 = scmp.eq.s32.totalorder %s14, 0
      %p41 = por %p39, %p40
      %s43 = sadd.s32 %s42, 1
      %p46 = scmp.eq.s32.totalorder %s8, 1
      %p47 = scmp.ne.s32.totalorder %s42, %s44
      %p48 = scmp.eq.s32.totalorder %s8, 0
      %p49 = por %p47, %p48
      %p50 = scmp.ne.s32.totalorder %s42, %s44
      %p51 = scmp.eq.s32.totalorder %s13, 1
      %p52 = por %p50, %p51
      %p53 = scmp.ne.s32.totalorder %s44, %s45
      %p54 = scmp.eq.s32.totalorder %s13, 0
      %p55 = por %p53, %p54
      %p56 = scmp.ne.s32.totalorder %s44, %s45
      %p57 = scmp.eq.s32.totalorder %s14, 1
      %p58 = por %p56, %p57
      %p60 = scmp.ne.s32.totalorder %s45, %s59
      %p61 = scmp.eq.s32.totalorder %s14, 0
      %p62 = por %p60, %p61
      %s63 = ssub.s32 %s8, %s15
      %p64 = scmp.eq.s32.totalorder %s63, 0
      %s66 = sadd.s32 %s65, 1
      %s67 = scalar_select %p64, %s65, %s66
      %p70 = pneg %p64
      %p71 = scmp.eq.s32.totalorder %s8, 1
      %p72 = por %p70, %p71
      %p73 = scmp.ne.s32.totalorder %s65, %s68
      %p74 = scmp.eq.s32.totalorder %s8, 0
      %p75 = por %p73, %p74
      %p76 = scmp.ne.s32.totalorder %s65, %s68
      %p77 = scmp.eq.s32.totalorder %s13, 1
      %p78 = por %p76, %p77
      %p79 = scmp.ne.s32.totalorder %s68, %s69
      %p80 = scmp.eq.s32.totalorder %s13, 0
      %p81 = por %p79, %p80
      %p82 = scmp.ne.s32.totalorder %s68, %s69
      %p83 = scmp.eq.s32.totalorder %s14, 1
      %p84 = por %p82, %p83
      %p86 = scmp.ne.s32.totalorder %s69, %s85
      %p87 = scmp.eq.s32.totalorder %s14, 0
      %p88 = por %p86, %p87
      %p89 = scmp.le.s32.totalorder 1, %s8
      %p90 = scmp.lt.s32.totalorder %s8, 3
      %p91 = pnand %p89, %p90
      %p92 = pneg %p91
      // Predicated region
      $region9: #{net1_forward.3} parent=5 // pred_check
        _
      $region10: #{net1_forward.3} parent=5 // pred_check_branch
        %94 = sbr.rel (%p91) target = $region12
      $region11: #{net1_forward.3} parent=5 // pred_region
        %s95 = ssub.s32 %s8, 1
        // Predicated region
        $region13: #{net1_forward.3} parent=11 // pred_check
          %p96 = pneg %p55
        $region14: #{net1_forward.3} parent=11 // pred_check_branch
          %98 = sbr.rel (%p96) target = $region16
        $region15: #{net1_forward.3} parent=11 // pred_region
          _
        $region16: #{net1_forward.3} parent=11 // pred_fallthru
          _
      $region12: #{net1_forward.3} parent=5 // pred_fallthru
        _
      %p99 = scmp.lt.s32.totalorder %s8, 2
      // Predicated region
      $region17: #{net1_forward.3} parent=5 // pred_check
        %p100 = pneg %p99
      $region18: #{net1_forward.3} parent=5 // pred_check_branch
        %102 = sbr.rel (%p100) target = $region20
      $region19: #{net1_forward.3} parent=5 // pred_region
        // Predicated region
        $region21: #{net1_forward.3} parent=19 // pred_check
          %p103 = pneg %p28
        $region22: #{net1_forward.3} parent=19 // pred_check_branch
          %105 = sbr.rel (%p103) target = $region24
        $region23: #{net1_forward.3} parent=19 // pred_region
          %s106 = sand.u32 %s18, 1
          %s107 = sand.u32 %s18, 1
          %s108 = smul.addr %s107, 128
          %s109 = scalar_lea.vmem [#allocation2], %s108
          %s110 = smul.u32 2, %s8
          %s111 = smul.addr %s110, 4
          %s112 = scalar_lea.vmem %s0, %s111
          // Predicated region
          $region25: #{net1_forward.3} parent=23 // pred_check
            _
          $region26: #{net1_forward.3} parent=23 // pred_check_branch
            %114 = sbr.rel (0) target = $region28
          $region27: #{net1_forward.3} parent=23 // pred_region
            // Predicated region
            $region29: #{net1_forward.3} parent=27 // pred_check
              _
            $region30: #{net1_forward.3} parent=27 // pred_check_branch
              %116 = sbr.rel (0) target = $region32
            $region31: #{net1_forward.3} parent=27 // pred_region
              // Predicated region
              $region44: #{net1_forward.3} parent=31 // pred_check
                _
              $region45: #{net1_forward.3} parent=31 // pred_check_branch
                %161 = sbr.rel (0) target = $region47
              $region46: #{net1_forward.3} parent=31 // pred_region
                loop: start=0, step=1, limit=1
                $region48: #{net1_forward.3} parent=46 // loop_pre_header
                  _
                $region49: #{net1_forward.3} parent=46 // loop_header
                  %s163 = sphi 0, %s167
                  %p164 = scmp.ge.s32.totalorder %s163, 1
                  %s168 = sphi %s112, %s112
                  %s169 = sphi %s109, %s109
                $region50: #{net1_forward.3} parent=46 // loop_header_branch
                  %166 = sbr.rel (%p164) target = $region54
                $region51: #{net1_forward.3} parent=46 // loop_body
                  %v170 = vld [vmem:[%s168] sm:$0xff]
                  %171 = vst [vmem:[%s169] sm:$0xff] %v170
                  %v172 = vld [vmem:[%s168 + $0x10] sm:$0xff]
                  %173 = vst [vmem:[%s169 + $0x8] sm:$0xff] %v172
                  %v174 = vld [vmem:[%s168 + $0x20] sm:$0xff]
                  %175 = vst [vmem:[%s169 + $0x10] sm:$0xff] %v174
                  %v176 = vld [vmem:[%s168 + $0x30] sm:$0xff]
                  %177 = vst [vmem:[%s169 + $0x18] sm:$0xff] %v176
                  %v178 = vld [vmem:[%s168 + $0x40] sm:$0xff]
                  %179 = vst [vmem:[%s169 + $0x20] sm:$0xff] %v178
                  %v180 = vld [vmem:[%s168 + $0x50] sm:$0xff]
                  %181 = vst [vmem:[%s169 + $0x28] sm:$0xff] %v180
                  %v182 = vld [vmem:[%s168 + $0x60] sm:$0xff]
                  %183 = vst [vmem:[%s169 + $0x30] sm:$0xff] %v182
                  %v184 = vld [vmem:[%s168 + $0x70] sm:$0xff]
                  %185 = vst [vmem:[%s169 + $0x38] sm:$0xff] %v184
                  %v186 = vld [vmem:[%s168 + $0x80] sm:$0xff]
                  %187 = vst [vmem:[%s169 + $0x40] sm:$0xff] %v186
                  %v188 = vld [vmem:[%s168 + $0x90] sm:$0xff]
                  %189 = vst [vmem:[%s169 + $0x48] sm:$0xff] %v188
                  %v190 = vld [vmem:[%s168 + $0xa0] sm:$0xff]
                  %191 = vst [vmem:[%s169 + $0x50] sm:$0xff] %v190
                  %v192 = vld [vmem:[%s168 + $0xb0] sm:$0xff]
                  %193 = vst [vmem:[%s169 + $0x58] sm:$0xff] %v192
                  %v194 = vld [vmem:[%s168 + $0xc0] sm:$0xff]
                  %195 = vst [vmem:[%s169 + $0x60] sm:$0xff] %v194
                  %v196 = vld [vmem:[%s168 + $0xd0] sm:$0xff]
                  %197 = vst [vmem:[%s169 + $0x68] sm:$0xff] %v196
                  %v198 = vld [vmem:[%s168 + $0xe0] sm:$0xff]
                  %199 = vst [vmem:[%s169 + $0x70] sm:$0xff] %v198
                  %v200 = vld [vmem:[%s168 + $0xf0] sm:$0xff]
                  %201 = vst [vmem:[%s169 + $0x78] sm:$0xff] %v200
                $region52: #{net1_forward.3} parent=46 // loop_footer
                  %s167 = sadd.s32 1, %s163
                $region53: #{net1_forward.3} parent=46 // loop_footer_branch
                  %162 = sbr.rel target = $region49
                $region54: #{net1_forward.3} parent=46 // loop_exit
                  _
              $region47: #{net1_forward.3} parent=31 // pred_fallthru
                _
              // Predicated region
              $region55: #{net1_forward.3} parent=31 // pred_check
                _
              $region56: #{net1_forward.3} parent=31 // pred_check_branch
                %203 = sbr.rel target = $region58
              $region57: #{net1_forward.3} parent=31 // pred_region
                _
              $region58: #{net1_forward.3} parent=31 // pred_fallthru
                _
            $region32: #{net1_forward.3} parent=27 // pred_fallthru
              _
            // Predicated region
            $region33: #{net1_forward.3} parent=27 // pred_check
              _
            $region34: #{net1_forward.3} parent=27 // pred_check_branch
              %118 = sbr.rel target = $region36
            $region35: #{net1_forward.3} parent=27 // pred_region
              loop: start=0, step=1, limit=1
              $region37: #{net1_forward.3} parent=35 // loop_pre_header
                _
              $region38: #{net1_forward.3} parent=35 // loop_header
                %s121 = sphi 0, %s125
                %p122 = scmp.ge.s32.totalorder %s121, 1
                %s126 = sphi %s112, %s112
                %s127 = sphi %s109, %s109
              $region39: #{net1_forward.3} parent=35 // loop_header_branch
                %124 = sbr.rel (%p122) target = $region43
              $region40: #{net1_forward.3} parent=35 // loop_body
                %v128 = vld [vmem:[%s126] sm:$0xff]
                %129 = vst [vmem:[%s127] sm:$0xff] %v128
                %v130 = vld [vmem:[%s126 + $0x10] sm:$0xff]
                %131 = vst [vmem:[%s127 + $0x8] sm:$0xff] %v130
                %v132 = vld [vmem:[%s126 + $0x20] sm:$0xff]
                %133 = vst [vmem:[%s127 + $0x10] sm:$0xff] %v132
                %v134 = vld [vmem:[%s126 + $0x30] sm:$0xff]
                %135 = vst [vmem:[%s127 + $0x18] sm:$0xff] %v134
                %v136 = vld [vmem:[%s126 + $0x40] sm:$0xff]
                %137 = vst [vmem:[%s127 + $0x20] sm:$0xff] %v136
                %v138 = vld [vmem:[%s126 + $0x50] sm:$0xff]
                %139 = vst [vmem:[%s127 + $0x28] sm:$0xff] %v138
                %v140 = vld [vmem:[%s126 + $0x60] sm:$0xff]
                %141 = vst [vmem:[%s127 + $0x30] sm:$0xff] %v140
                %v142 = vld [vmem:[%s126 + $0x70] sm:$0xff]
                %143 = vst [vmem:[%s127 + $0x38] sm:$0xff] %v142
                %v144 = vld [vmem:[%s126 + $0x80] sm:$0xff]
                %145 = vst [vmem:[%s127 + $0x40] sm:$0xff] %v144
                %v146 = vld [vmem:[%s126 + $0x90] sm:$0xff]
                %147 = vst [vmem:[%s127 + $0x48] sm:$0xff] %v146
                %v148 = vld [vmem:[%s126 + $0xa0] sm:$0xff]
                %149 = vst [vmem:[%s127 + $0x50] sm:$0xff] %v148
                %v150 = vld [vmem:[%s126 + $0xb0] sm:$0xff]
                %151 = vst [vmem:[%s127 + $0x58] sm:$0xff] %v150
                %v152 = vld [vmem:[%s126 + $0xc0] sm:$0xff]
                %153 = vst [vmem:[%s127 + $0x60] sm:$0xff] %v152
                %v154 = vld [vmem:[%s126 + $0xd0] sm:$0xff]
                %155 = vst [vmem:[%s127 + $0x68] sm:$0xff] %v154
                %v156 = vld [vmem:[%s126 + $0xe0] sm:$0xff]
                %157 = vst [vmem:[%s127 + $0x70] sm:$0xff] %v156
                %v158 = vld [vmem:[%s126 + $0xf0] sm:$0xff]
                %159 = vst [vmem:[%s127 + $0x78] sm:$0xff] %v158
              $region41: #{net1_forward.3} parent=35 // loop_footer
                %s125 = sadd.s32 1, %s121
              $region42: #{net1_forward.3} parent=35 // loop_footer_branch
                %120 = sbr.rel target = $region38
              $region43: #{net1_forward.3} parent=35 // loop_exit
                _
            $region36: #{net1_forward.3} parent=27 // pred_fallthru
              _
          $region28: #{net1_forward.3} parent=23 // pred_fallthru
            _
          %204 = vnop
        $region24: #{net1_forward.3} parent=19 // pred_fallthru
          _
      $region20: #{net1_forward.3} parent=5 // pred_fallthru
        _
      %p205 = scmp.le.s32.totalorder 1, %s8
      %p206 = scmp.lt.s32.totalorder %s8, 3
      %p207 = pnand %p205, %p206
      %p208 = pneg %p207
      // Predicated region
      $region59: #{net1_forward.3} parent=5 // pred_check
        _
      $region60: #{net1_forward.3} parent=5 // pred_check_branch
        %210 = sbr.rel (%p207) target = $region62
      $region61: #{net1_forward.3} parent=5 // pred_region
        %s211 = ssub.s32 %s8, 1
        %s212 = sand.u32 %s21, 1
        %s213 = sand.u32 %s21, 1
        %s214 = smul.addr %s213, 128
        %s215 = scalar_lea.vmem [#allocation2], %s214
        // Predicated region
        $region63: #{net1_forward.3} parent=61 // pred_check
          %p216 = pneg %p34
        $region64: #{net1_forward.3} parent=61 // pred_check_branch
          %218 = sbr.rel (%p216) target = $region66
        $region65: #{net1_forward.3} parent=61 // pred_region
          _
        $region66: #{net1_forward.3} parent=61 // pred_fallthru
          _
        %s219 = sand.u32 %s21, 1
        %s220 = sand.u32 %s21, 1
        %s221 = smul.addr %s220, 128
        %s222 = scalar_lea.vmem [#allocation2], %s221
        %p223 = pneg %p34
        %p224 = pneg %p31
        %p225 = pneg %p55
        %p226 = pneg %p52
        %p227 = pneg %p81
        %p228 = pneg %p78
        %s229 = sand.u32 %s68, 1
        %s230 = sand.u32 %s68, 1
        %s231 = smul.addr %s230, 16
        %s232 = scalar_lea.vmem [#allocation3], %s231
        %s233 = smul.u32 2, %s13
        %s234 = smul.u32 2, %s13
        %v236 = vld [vmem:[%s1] sm:$0xf]
        %v237 = vld [vmem:[%s1 + $0x4] sm:$0x1]
        %v238 = vld [vmem:[%s215] sm:$0xff]
        %v239 = vld [vmem:[%s215 + $0x8] sm:$0xff]
        %v240 = vld [vmem:[%s215 + $0x10] sm:$0xff]
        %v241 = vld [vmem:[%s215 + $0x18] sm:$0x11]
        %v244 = vunpack.c.l.b16 %v236
        %v245 = vunpack.c.l.b16 %v237
        %v246 = vpack.c.b16 %v245, %v244
        %v251 = vunpack.c.l.b16 %v238
        %v252 = vunpack.c.h.b16 %v238
        %v253 = vunpack.c.l.b16 %v239
        %v254 = vunpack.c.h.b16 %v239
        %v255 = vunpack.c.l.b16 %v240
        %v256 = vunpack.c.h.b16 %v240
        %v257 = vunpack.c.l.b16 %v241
        %v258 = vunpack.c.h.b16 %v241
        %v259 = vpack.c.b16 %v253, %v251
        %v260 = vpack.c.b16 %v254, %v252
        %v261 = vpack.c.b16 %v257, %v255
        %v262 = vpack.c.b16 %v258, %v256
        %vm265 = vcmask 211968
        %v267 = vsel %vm265, %v246, 0
        %vm269 = vcmask 1044480
        %v271 = vsel %vm269, %v261, 0
        %v274 = vsel %vm269, %v262, 0
        %276 = vmatprep.subr.bf16.mxu0 %v260
        %277 = vmatpush1.bf16.msra.mxu0 %v259
        %278 = vmatprep.subr.bf16.mxu0 %v274
        %279 = vmatpush1.bf16.msra.mxu0 %v271
        %280 = vmatprep.subr.bf16.mxu0 0
        %281 = vmatpush1.bf16.msra.mxu0 0
        %282 = vmatprep.subr.bf16.mxu0 0
        %283 = vmatpush1.bf16.msra.mxu0 0
        %284 = vmatprep.subr.bf16.mxu0 0
        %285 = vmatpush1.bf16.msra.mxu0 0
        %286 = vmatprep.subr.bf16.mxu0 0
        %287 = vmatpush1.bf16.msra.mxu0 0
        %288 = vmatprep.subr.bf16.mxu0 0
        %289 = vmatpush1.bf16.msra.mxu0 0
        %290 = vmatprep.subr.bf16.mxu0 0
        %291 = vmatpush1.bf16.msra.mxu0 0
        %292 = vmatprep.subr.bf16.mxu0 0
        %293 = vmatpush1.bf16.msra.mxu0 0
        %294 = vmatprep.subr.bf16.mxu0 0
        %295 = vmatpush1.bf16.msra.mxu0 0
        %296 = vmatprep.subr.bf16.mxu0 0
        %297 = vmatpush1.bf16.msra.mxu0 0
        %298 = vmatprep.subr.bf16.mxu0 0
        %299 = vmatpush1.bf16.msra.mxu0 0
        %300 = vmatprep.subr.bf16.mxu0 0
        %301 = vmatpush1.bf16.msra.mxu0 0
        %302 = vmatprep.subr.bf16.mxu0 0
        %303 = vmatpush1.bf16.msra.mxu0 0
        %304 = vmatprep.subr.bf16.mxu0 0
        %305 = vmatpush1.bf16.msra.mxu0 0
        %306 = vmatprep.subr.bf16.mxu0 0
        %307 = vmatpush1.bf16.msra.mxu0 0
        %308 = vmatprep.mubr.bf16.mxu0 0
        %309 = vmatmul.mubr.bf16.gmra.mrb[0].mxu0 %v267
        %v310 = vpop.f32.mrb[0].mxu0
        %v311 = vadd.f32 0.0, %v310
        %v312 = vpop.f32.mrb[0].mxu0
        %v313 = vadd.f32 0.0, %v312
        %v314 = vpop.f32.mrb[0].mxu0
        %v315 = vadd.f32 0.0, %v314
        %v316 = vpop.f32.mrb[0].mxu0
        %v317 = vadd.f32 0.0, %v316
        %318 = vdwg.mxu0
        %s319 = scalar_lea.vmem %s215, 32 [#allocation2]
        %v320 = vld [vmem:[%s319] sm:$0xff]
        %v321 = vld [vmem:[%s319 + $0x8] sm:$0xff]
        %v322 = vld [vmem:[%s319 + $0x10] sm:$0xff]
        %v323 = vld [vmem:[%s319 + $0x18] sm:$0x11]
        %v328 = vunpack.c.l.b16 %v320
        %v329 = vunpack.c.h.b16 %v320
        %v330 = vunpack.c.l.b16 %v321
        %v331 = vunpack.c.h.b16 %v321
        %v332 = vunpack.c.l.b16 %v322
        %v333 = vunpack.c.h.b16 %v322
        %v334 = vunpack.c.l.b16 %v323
        %v335 = vunpack.c.h.b16 %v323
        %v336 = vpack.c.b16 %v330, %v328
        %v337 = vpack.c.b16 %v331, %v329
        %v338 = vpack.c.b16 %v334, %v332
        %v339 = vpack.c.b16 %v335, %v333
        %v343 = vsel %vm269, %v338, 0
        %v346 = vsel %vm269, %v339, 0
        %348 = vmatprep.subr.bf16.mxu0 %v337
        %349 = vmatpush1.bf16.msra.mxu0 %v336
        %350 = vmatprep.subr.bf16.mxu0 %v346
        %351 = vmatpush1.bf16.msra.mxu0 %v343
        %352 = vmatprep.subr.bf16.mxu0 0
        %353 = vmatpush1.bf16.msra.mxu0 0
        %354 = vmatprep.subr.bf16.mxu0 0
        %355 = vmatpush1.bf16.msra.mxu0 0
        %356 = vmatprep.subr.bf16.mxu0 0
        %357 = vmatpush1.bf16.msra.mxu0 0
        %358 = vmatprep.subr.bf16.mxu0 0
        %359 = vmatpush1.bf16.msra.mxu0 0
        %360 = vmatprep.subr.bf16.mxu0 0
        %361 = vmatpush1.bf16.msra.mxu0 0
        %362 = vmatprep.subr.bf16.mxu0 0
        %363 = vmatpush1.bf16.msra.mxu0 0
        %364 = vmatprep.subr.bf16.mxu0 0
        %365 = vmatpush1.bf16.msra.mxu0 0
        %366 = vmatprep.subr.bf16.mxu0 0
        %367 = vmatpush1.bf16.msra.mxu0 0
        %368 = vmatprep.subr.bf16.mxu0 0
        %369 = vmatpush1.bf16.msra.mxu0 0
        %370 = vmatprep.subr.bf16.mxu0 0
        %371 = vmatpush1.bf16.msra.mxu0 0
        %372 = vmatprep.subr.bf16.mxu0 0
        %373 = vmatpush1.bf16.msra.mxu0 0
        %374 = vmatprep.subr.bf16.mxu0 0
        %375 = vmatpush1.bf16.msra.mxu0 0
        %376 = vmatprep.subr.bf16.mxu0 0
        %377 = vmatpush1.bf16.msra.mxu0 0
        %378 = vmatprep.subr.bf16.mxu0 0
        %379 = vmatpush1.bf16.msra.mxu0 0
        %380 = vmatprep.mubr.bf16.mxu0 0
        %381 = vmatmul.mubr.bf16.gmra.mrb[0].mxu0 %v267
        %v382 = vpop.f32.mrb[0].mxu0
        %v383 = vadd.f32 0.0, %v382
        %v384 = vpop.f32.mrb[0].mxu0
        %v385 = vadd.f32 0.0, %v384
        %v386 = vpop.f32.mrb[0].mxu0
        %v387 = vadd.f32 0.0, %v386
        %v388 = vpop.f32.mrb[0].mxu0
        %v389 = vadd.f32 0.0, %v388
        %390 = vdwg.mxu0
        %s391 = scalar_lea.vmem %s215, 64 [#allocation2]
        %v392 = vld [vmem:[%s391] sm:$0xff]
        %v393 = vld [vmem:[%s391 + $0x8] sm:$0xff]
        %v394 = vld [vmem:[%s391 + $0x10] sm:$0xff]
        %v395 = vld [vmem:[%s391 + $0x18] sm:$0x11]
        %v400 = vunpack.c.l.b16 %v392
        %v401 = vunpack.c.h.b16 %v392
        %v402 = vunpack.c.l.b16 %v393
        %v403 = vunpack.c.h.b16 %v393
        %v404 = vunpack.c.l.b16 %v394
        %v405 = vunpack.c.h.b16 %v394
        %v406 = vunpack.c.l.b16 %v395
        %v407 = vunpack.c.h.b16 %v395
        %v408 = vpack.c.b16 %v402, %v400
        %v409 = vpack.c.b16 %v403, %v401
        %v410 = vpack.c.b16 %v406, %v404
        %v411 = vpack.c.b16 %v407, %v405
        %v415 = vsel %vm269, %v410, 0
        %v418 = vsel %vm269, %v411, 0
        %420 = vmatprep.subr.bf16.mxu0 %v409
        %421 = vmatpush1.bf16.msra.mxu0 %v408
        %422 = vmatprep.subr.bf16.mxu0 %v418
        %423 = vmatpush1.bf16.msra.mxu0 %v415
        %424 = vmatprep.subr.bf16.mxu0 0
        %425 = vmatpush1.bf16.msra.mxu0 0
        %426 = vmatprep.subr.bf16.mxu0 0
        %427 = vmatpush1.bf16.msra.mxu0 0
        %428 = vmatprep.subr.bf16.mxu0 0
        %429 = vmatpush1.bf16.msra.mxu0 0
        %430 = vmatprep.subr.bf16.mxu0 0
        %431 = vmatpush1.bf16.msra.mxu0 0
        %432 = vmatprep.subr.bf16.mxu0 0
        %433 = vmatpush1.bf16.msra.mxu0 0
        %434 = vmatprep.subr.bf16.mxu0 0
        %435 = vmatpush1.bf16.msra.mxu0 0
        %436 = vmatprep.subr.bf16.mxu0 0
        %437 = vmatpush1.bf16.msra.mxu0 0
        %438 = vmatprep.subr.bf16.mxu0 0
        %439 = vmatpush1.bf16.msra.mxu0 0
        %440 = vmatprep.subr.bf16.mxu0 0
        %441 = vmatpush1.bf16.msra.mxu0 0
        %442 = vmatprep.subr.bf16.mxu0 0
        %443 = vmatpush1.bf16.msra.mxu0 0
        %444 = vmatprep.subr.bf16.mxu0 0
        %445 = vmatpush1.bf16.msra.mxu0 0
        %446 = vmatprep.subr.bf16.mxu0 0
        %447 = vmatpush1.bf16.msra.mxu0 0
        %448 = vmatprep.subr.bf16.mxu0 0
        %449 = vmatpush1.bf16.msra.mxu0 0
        %450 = vmatprep.subr.bf16.mxu0 0
        %451 = vmatpush1.bf16.msra.mxu0 0
        %452 = vmatprep.mubr.bf16.mxu0 0
        %453 = vmatmul.mubr.bf16.gmra.mrb[0].mxu0 %v267
        %v454 = vpop.f32.mrb[0].mxu0
        %v455 = vadd.f32 0.0, %v454
        %v456 = vpop.f32.mrb[0].mxu0
        %v457 = vadd.f32 0.0, %v456
        %v458 = vpop.f32.mrb[0].mxu0
        %v459 = vadd.f32 0.0, %v458
        %v460 = vpop.f32.mrb[0].mxu0
        %v461 = vadd.f32 0.0, %v460
        %462 = vdwg.mxu0
        %s463 = scalar_lea.vmem %s215, 96 [#allocation2]
        %v464 = vld [vmem:[%s463] sm:$0xff]
        %v465 = vld [vmem:[%s463 + $0x8] sm:$0xff]
        %v466 = vld [vmem:[%s463 + $0x10] sm:$0xff]
        %v467 = vld [vmem:[%s463 + $0x18] sm:$0x11]
        %v472 = vunpack.c.l.b16 %v464
        %v473 = vunpack.c.h.b16 %v464
        %v474 = vunpack.c.l.b16 %v465
        %v475 = vunpack.c.h.b16 %v465
        %v476 = vunpack.c.l.b16 %v466
        %v477 = vunpack.c.h.b16 %v466
        %v478 = vunpack.c.l.b16 %v467
        %v479 = vunpack.c.h.b16 %v467
        %v480 = vpack.c.b16 %v474, %v472
        %v481 = vpack.c.b16 %v475, %v473
        %v482 = vpack.c.b16 %v478, %v476
        %v483 = vpack.c.b16 %v479, %v477
        %v487 = vsel %vm269, %v482, 0
        %v490 = vsel %vm269, %v483, 0
        %492 = vmatprep.subr.bf16.mxu0 %v481
        %493 = vmatpush1.bf16.msra.mxu0 %v480
        %494 = vmatprep.subr.bf16.mxu0 %v490
        %495 = vmatpush1.bf16.msra.mxu0 %v487
        %496 = vmatprep.subr.bf16.mxu0 0
        %497 = vmatpush1.bf16.msra.mxu0 0
        %498 = vmatprep.subr.bf16.mxu0 0
        %499 = vmatpush1.bf16.msra.mxu0 0
        %500 = vmatprep.subr.bf16.mxu0 0
        %501 = vmatpush1.bf16.msra.mxu0 0
        %502 = vmatprep.subr.bf16.mxu0 0
        %503 = vmatpush1.bf16.msra.mxu0 0
        %504 = vmatprep.subr.bf16.mxu0 0
        %505 = vmatpush1.bf16.msra.mxu0 0
        %506 = vmatprep.subr.bf16.mxu0 0
        %507 = vmatpush1.bf16.msra.mxu0 0
        %508 = vmatprep.subr.bf16.mxu0 0
        %509 = vmatpush1.bf16.msra.mxu0 0
        %510 = vmatprep.subr.bf16.mxu0 0
        %511 = vmatpush1.bf16.msra.mxu0 0
        %512 = vmatprep.subr.bf16.mxu0 0
        %513 = vmatpush1.bf16.msra.mxu0 0
        %514 = vmatprep.subr.bf16.mxu0 0
        %515 = vmatpush1.bf16.msra.mxu0 0
        %516 = vmatprep.subr.bf16.mxu0 0
        %517 = vmatpush1.bf16.msra.mxu0 0
        %518 = vmatprep.subr.bf16.mxu0 0
        %519 = vmatpush1.bf16.msra.mxu0 0
        %520 = vmatprep.subr.bf16.mxu0 0
        %521 = vmatpush1.bf16.msra.mxu0 0
        %522 = vmatprep.subr.bf16.mxu0 0
        %523 = vmatpush1.bf16.msra.mxu0 0
        %524 = vmatprep.mubr.bf16.mxu0 0
        %525 = vmatmul.mubr.bf16.gmra.mrb[0].mxu0 %v267
        %v526 = vpop.f32.mrb[0].mxu0
        %v527 = vadd.f32 0.0, %v526
        %v528 = vpop.f32.mrb[0].mxu0
        %v529 = vadd.f32 0.0, %v528
        %v530 = vpop.f32.mrb[0].mxu0
        %v531 = vadd.f32 0.0, %v530
        %v532 = vpop.f32.mrb[0].mxu0
        %v533 = vadd.f32 0.0, %v532
        %534 = vdwg.mxu0
        %v535 = vmax.f32 %v311, %v383
        %v536 = vmax.f32 %v313, %v385
        %v537 = vmax.f32 %v315, %v387
        %v538 = vmax.f32 %v317, %v389
        %v539 = vmax.f32 %v455, %v527
        %v540 = vmax.f32 %v457, %v529
        %v541 = vmax.f32 %v459, %v531
        %v542 = vmax.f32 %v461, %v533
        %v543 = vmax.f32 %v535, %v539
        %v544 = vmax.f32 %v536, %v540
        %v545 = vmax.f32 %v537, %v541
        %v546 = vmax.f32 %v538, %v542
        %v547 = vmax.f32 %v543, 0.0
        %v548 = vmax.f32 %v544, 0.0
        %v549 = vmax.f32 %v545, 0.0
        %v550 = vmax.f32 %v546, 0.0
        %v551 = vpack.c.bf16 %v549, %v547
        %v552 = vpack.c.bf16 %v550, %v548
        %v555 = vunpack.c.l.b16 %v551
        %v556 = vunpack.c.l.b16 %v552
        %v557 = vunpack.c.h.b16 %v551
        %v558 = vunpack.c.h.b16 %v552
        %v559 = vpack.c.b16 %v556, %v555
        %v560 = vpack.c.b16 %v558, %v557
        %563 = vst [vmem:[%s232] sm:$0xff] %v559
        %564 = vst [vmem:[%s232 + $0x8] sm:$0x11] %v560
        %s565 = sand.u32 %s68, 1
        %s566 = sand.u32 %s68, 1
        %s567 = smul.addr %s566, 16
        %s568 = scalar_lea.vmem [#allocation3], %s567
        // Predicated region
        $region67: #{net1_forward.3} parent=61 // pred_check
          %p569 = pneg %p78
        $region68: #{net1_forward.3} parent=61 // pred_check_branch
          %571 = sbr.rel (%p569) target = $region70
        $region69: #{net1_forward.3} parent=61 // pred_region
          %s572 = smul.u32 2, %s13
          %s573 = smul.addr %s572, 4
          %s574 = scalar_lea.vmem %s2, %s573
          // Predicated region
          $region71: #{net1_forward.3} parent=69 // pred_check
            _
          $region72: #{net1_forward.3} parent=69 // pred_check_branch
            %576 = sbr.rel (0) target = $region74
          $region73: #{net1_forward.3} parent=69 // pred_region
            // Predicated region
            $region75: #{net1_forward.3} parent=73 // pred_check
              _
            $region76: #{net1_forward.3} parent=73 // pred_check_branch
              %578 = sbr.rel (0) target = $region78
            $region77: #{net1_forward.3} parent=73 // pred_region
              // Predicated region
              $region90: #{net1_forward.3} parent=77 // pred_check
                _
              $region91: #{net1_forward.3} parent=77 // pred_check_branch
                %595 = sbr.rel (0) target = $region93
              $region92: #{net1_forward.3} parent=77 // pred_region
                loop: start=0, step=1, limit=1
                $region94: #{net1_forward.3} parent=92 // loop_pre_header
                  _
                $region95: #{net1_forward.3} parent=92 // loop_header
                  %s597 = sphi 0, %s601
                  %p598 = scmp.ge.s32.totalorder %s597, 1
                  %s602 = sphi %s568, %s568
                  %s603 = sphi %s574, %s574
                $region96: #{net1_forward.3} parent=92 // loop_header_branch
                  %600 = sbr.rel (%p598) target = $region100
                $region97: #{net1_forward.3} parent=92 // loop_body
                  %v604 = vld [vmem:[%s602] sm:$0xff]
                  %605 = vst [vmem:[%s603] sm:$0xff] %v604
                  %v606 = vld [vmem:[%s602 + $0x8] sm:$0xff]
                  %607 = vst [vmem:[%s603 + $0x10] sm:$0xff] %v606
                $region98: #{net1_forward.3} parent=92 // loop_footer
                  %s601 = sadd.s32 1, %s597
                $region99: #{net1_forward.3} parent=92 // loop_footer_branch
                  %596 = sbr.rel target = $region95
                $region100: #{net1_forward.3} parent=92 // loop_exit
                  _
              $region93: #{net1_forward.3} parent=77 // pred_fallthru
                _
              // Predicated region
              $region101: #{net1_forward.3} parent=77 // pred_check
                _
              $region102: #{net1_forward.3} parent=77 // pred_check_branch
                %609 = sbr.rel target = $region104
              $region103: #{net1_forward.3} parent=77 // pred_region
                _
              $region104: #{net1_forward.3} parent=77 // pred_fallthru
                _
            $region78: #{net1_forward.3} parent=73 // pred_fallthru
              _
            // Predicated region
            $region79: #{net1_forward.3} parent=73 // pred_check
              _
            $region80: #{net1_forward.3} parent=73 // pred_check_branch
              %580 = sbr.rel target = $region82
            $region81: #{net1_forward.3} parent=73 // pred_region
              loop: start=0, step=1, limit=1
              $region83: #{net1_forward.3} parent=81 // loop_pre_header
                _
              $region84: #{net1_forward.3} parent=81 // loop_header
                %s583 = sphi 0, %s587
                %p584 = scmp.ge.s32.totalorder %s583, 1
                %s588 = sphi %s568, %s568
                %s589 = sphi %s574, %s574
              $region85: #{net1_forward.3} parent=81 // loop_header_branch
                %586 = sbr.rel (%p584) target = $region89
              $region86: #{net1_forward.3} parent=81 // loop_body
                %v590 = vld [vmem:[%s588] sm:$0xff]
                %591 = vst [vmem:[%s589] sm:$0xff] %v590
                %v592 = vld [vmem:[%s588 + $0x8] sm:$0xff]
                %593 = vst [vmem:[%s589 + $0x10] sm:$0xff] %v592
              $region87: #{net1_forward.3} parent=81 // loop_footer
                %s587 = sadd.s32 1, %s583
              $region88: #{net1_forward.3} parent=81 // loop_footer_branch
                %582 = sbr.rel target = $region84
              $region89: #{net1_forward.3} parent=81 // loop_exit
                _
            $region82: #{net1_forward.3} parent=73 // pred_fallthru
              _
          $region74: #{net1_forward.3} parent=69 // pred_fallthru
            _
          %610 = vnop
        $region70: #{net1_forward.3} parent=61 // pred_fallthru
          _
      $region62: #{net1_forward.3} parent=5 // pred_fallthru
        _
      %p611 = scmp.le.s32.totalorder 2, %s8
      // Predicated region
      $region105: #{net1_forward.3} parent=5 // pred_check
        %p612 = pneg %p611
      $region106: #{net1_forward.3} parent=5 // pred_check_branch
        %614 = sbr.rel (%p612) target = $region108
      $region107: #{net1_forward.3} parent=5 // pred_region
        %s615 = ssub.s32 %s8, 2
        // Predicated region
        $region109: #{net1_forward.3} parent=107 // pred_check
          %p616 = pneg %p84
        $region110: #{net1_forward.3} parent=107 // pred_check_branch
          %618 = sbr.rel (%p616) target = $region112
        $region111: #{net1_forward.3} parent=107 // pred_region
          %s619 = sand.u32 %s69, 1
          %s620 = sand.u32 %s69, 1
          %s621 = smul.addr %s620, 16
          %s622 = scalar_lea.vmem [#allocation3], %s621
        $region112: #{net1_forward.3} parent=107 // pred_fallthru
          _
      $region108: #{net1_forward.3} parent=5 // pred_fallthru
        _
    $region6: #{net1_forward.3} parent=1 // loop_footer
      %s12 = sadd.s32 1, %s8
    $region7: #{net1_forward.3} parent=1 // loop_footer_branch
      %7 = sbr.rel target = $region3
    $region8: #{net1_forward.3} parent=1 // loop_exit
      _

// kernel: net1_forward.4
$region0: #{net1_forward.4}
  #allocation0 [shape = 'u32[]', space=smem, size = 0x4, offset = 0x4, fixed_abs, tag = 'smem constant byte address 0x4 - core index']
  #allocation1 [shape = 'u32[144,128]{1,0:T(1,128)}', space=vmem, size = 0x12000, scoped, tag = 'internal scratch']
  %s0 = inlined_call_operand.vmem [shape: bf16[4,251,128], index: 0, kind: input, shape index: {}]
  %s1 = inlined_call_operand.vmem [shape: bf16[20,251], index: 1, kind: input, shape index: {}]
  %s2 = inlined_call_operand.vmem [shape: bf16[20,128], index: 2, kind: output, shape index: {}]
  %s3 = sld [smem:[#allocation0]]
  $region18: #{net1_forward.4} parent=0
    _
  %s5 = ssub.s32 1, %s3
  %s6 = scalar_select 0, %s5, %s3
  // Predicated region
  $region2: #{net1_forward.4} parent=0 // pred_check
    _
  $region3: #{net1_forward.4} parent=0 // pred_check_branch
    %8 = sbr.rel (0) target = $region5
  $region4: #{net1_forward.4} parent=0 // pred_region
    _
  $region5: #{net1_forward.4} parent=0 // pred_fallthru
    _
  // Predicated region
  $region6: #{net1_forward.4} parent=0 // pred_check
    _
  $region7: #{net1_forward.4} parent=0 // pred_check_branch
    %10 = sbr.rel (0) target = $region9
  $region8: #{net1_forward.4} parent=0 // pred_region
    _
  $region9: #{net1_forward.4} parent=0 // pred_fallthru
    _
  %v12 = vld [vmem:[%s1] sm:$0xff]
  %v13 = vld [vmem:[%s1 + $0x8] sm:$0xff]
  %v14 = vld [vmem:[%s1 + $0x10] sm:$0x33]
  %v15 = vld [vmem:[%s0] sm:$0xf]
  %v16 = vld [vmem:[%s0 + $0x4] sm:$0xf]
  %v17 = vld [vmem:[%s0 + $0x8] sm:$0xf]
  %v18 = vld [vmem:[%s0 + $0xc] sm:$0xf]
  %v19 = vld [vmem:[%s0 + $0x10] sm:$0xf]
  %v20 = vld [vmem:[%s0 + $0x14] sm:$0xf]
  %v21 = vld [vmem:[%s0 + $0x18] sm:$0xf]
  %v22 = vld [vmem:[%s0 + $0x1c] sm:$0xf]
  %v23 = vld [vmem:[%s0 + $0x20] sm:$0xf]
  %v24 = vld [vmem:[%s0 + $0x24] sm:$0xf]
  %v25 = vld [vmem:[%s0 + $0x28] sm:$0xf]
  %v26 = vld [vmem:[%s0 + $0x2c] sm:$0xf]
  %v27 = vld [vmem:[%s0 + $0x30] sm:$0xf]
  %v28 = vld [vmem:[%s0 + $0x34] sm:$0xf]
  %v29 = vld [vmem:[%s0 + $0x38] sm:$0xf]
  %v30 = vld [vmem:[%s0 + $0x3c] sm:$0xf]
  %v31 = vld [vmem:[%s0 + $0x40] sm:$0xf]
  %v32 = vld [vmem:[%s0 + $0x44] sm:$0xf]
  %v33 = vld [vmem:[%s0 + $0x48] sm:$0xf]
  %v34 = vld [vmem:[%s0 + $0x4c] sm:$0xf]
  %v35 = vld [vmem:[%s0 + $0x50] sm:$0xf]
  %v36 = vld [vmem:[%s0 + $0x54] sm:$0xf]
  %v37 = vld [vmem:[%s0 + $0x58] sm:$0xf]
  %v38 = vld [vmem:[%s0 + $0x5c] sm:$0xf]
  %v39 = vld [vmem:[%s0 + $0x60] sm:$0xf]
  %v40 = vld [vmem:[%s0 + $0x64] sm:$0xf]
  %v41 = vld [vmem:[%s0 + $0x68] sm:$0xf]
  %v42 = vld [vmem:[%s0 + $0x6c] sm:$0xf]
  %v43 = vld [vmem:[%s0 + $0x70] sm:$0xf]
  %v44 = vld [vmem:[%s0 + $0x74] sm:$0xf]
  %v45 = vld [vmem:[%s0 + $0x78] sm:$0xf]
  %v46 = vld [vmem:[%s0 + $0x7c] sm:$0x3]
  %v50 = vunpack.c.l.b16 %v12
  %v51 = vunpack.c.h.b16 %v12
  %v52 = vunpack.c.l.b16 %v13
  %v53 = vunpack.c.h.b16 %v13
  %v54 = vunpack.c.l.b16 %v14
  %v55 = vunpack.c.h.b16 %v14
  %v56 = vpack.c.b16 %v52, %v50
  %v57 = vpack.c.b16 %v53, %v51
  %v58 = vpack.c.b16 %v54, %v54
  %v59 = vpack.c.b16 %v55, %v55
  %v94 = vunpack.c.l.b16 %v15
  %v95 = vunpack.c.l.b16 %v16
  %v96 = vunpack.c.l.b16 %v17
  %v97 = vunpack.c.l.b16 %v18
  %v98 = vunpack.c.l.b16 %v19
  %v99 = vunpack.c.l.b16 %v20
  %v100 = vunpack.c.l.b16 %v21
  %v101 = vunpack.c.l.b16 %v22
  %v102 = vunpack.c.l.b16 %v23
  %v103 = vunpack.c.l.b16 %v24
  %v104 = vunpack.c.l.b16 %v25
  %v105 = vunpack.c.l.b16 %v26
  %v106 = vunpack.c.l.b16 %v27
  %v107 = vunpack.c.l.b16 %v28
  %v108 = vunpack.c.l.b16 %v29
  %v109 = vunpack.c.l.b16 %v30
  %v110 = vunpack.c.l.b16 %v31
  %v111 = vunpack.c.l.b16 %v32
  %v112 = vunpack.c.l.b16 %v33
  %v113 = vunpack.c.l.b16 %v34
  %v114 = vunpack.c.l.b16 %v35
  %v115 = vunpack.c.l.b16 %v36
  %v116 = vunpack.c.l.b16 %v37
  %v117 = vunpack.c.l.b16 %v38
  %v118 = vunpack.c.l.b16 %v39
  %v119 = vunpack.c.l.b16 %v40
  %v120 = vunpack.c.l.b16 %v41
  %v121 = vunpack.c.l.b16 %v42
  %v122 = vunpack.c.l.b16 %v43
  %v123 = vunpack.c.l.b16 %v44
  %v124 = vunpack.c.l.b16 %v45
  %v125 = vunpack.c.l.b16 %v46
  %v126 = vpack.c.b16 %v95, %v94
  %v127 = vpack.c.b16 %v97, %v96
  %v128 = vpack.c.b16 %v99, %v98
  %v129 = vpack.c.b16 %v101, %v100
  %v130 = vpack.c.b16 %v103, %v102
  %v131 = vpack.c.b16 %v105, %v104
  %v132 = vpack.c.b16 %v107, %v106
  %v133 = vpack.c.b16 %v109, %v108
  %v134 = vpack.c.b16 %v111, %v110
  %v135 = vpack.c.b16 %v113, %v112
  %v136 = vpack.c.b16 %v115, %v114
  %v137 = vpack.c.b16 %v117, %v116
  %v138 = vpack.c.b16 %v119, %v118
  %v139 = vpack.c.b16 %v121, %v120
  %v140 = vpack.c.b16 %v123, %v122
  %v141 = vpack.c.b16 %v125, %v124
  %vm157 = vcmask 1006592
  %v159 = vsel %vm157, %v57, 0
  %v162 = vsel %vm157, %v59, 0
  %vm164 = vcmask 1044480
  %vm165 = vcmask 1045504
  %v166 = vsel %vm164, 4294967295, 65535
  %v167 = vsel %vm165, %v166, 0
  %v169 = vand.u32 %v141, %v167
  %171 = vmatprep.subr.bf16.mxu0 0
  %172 = vmatpush1.bf16.msra.mxu0 %v126
  %173 = vmatprep.subr.bf16.mxu0 0
  %174 = vmatpush1.bf16.msra.mxu0 %v127
  %175 = vmatprep.subr.bf16.mxu0 0
  %176 = vmatpush1.bf16.msra.mxu0 %v128
  %177 = vmatprep.subr.bf16.mxu0 0
  %178 = vmatpush1.bf16.msra.mxu0 %v129
  %179 = vmatprep.subr.bf16.mxu0 0
  %180 = vmatpush1.bf16.msra.mxu0 %v130
  %181 = vmatprep.subr.bf16.mxu0 0
  %182 = vmatpush1.bf16.msra.mxu0 %v131
  %183 = vmatprep.subr.bf16.mxu0 0
  %184 = vmatpush1.bf16.msra.mxu0 %v132
  %185 = vmatprep.subr.bf16.mxu0 0
  %186 = vmatpush1.bf16.msra.mxu0 %v133
  %187 = vmatprep.subr.bf16.mxu0 0
  %188 = vmatpush1.bf16.msra.mxu0 %v134
  %189 = vmatprep.subr.bf16.mxu0 0
  %190 = vmatpush1.bf16.msra.mxu0 %v135
  %191 = vmatprep.subr.bf16.mxu0 0
  %192 = vmatpush1.bf16.msra.mxu0 %v136
  %193 = vmatprep.subr.bf16.mxu0 0
  %194 = vmatpush1.bf16.msra.mxu0 %v137
  %195 = vmatprep.subr.bf16.mxu0 0
  %196 = vmatpush1.bf16.msra.mxu0 %v138
  %197 = vmatprep.subr.bf16.mxu0 0
  %198 = vmatpush1.bf16.msra.mxu0 %v139
  %199 = vmatprep.subr.bf16.mxu0 0
  %200 = vmatpush1.bf16.msra.mxu0 %v140
  %201 = vmatprep.subr.bf16.mxu0 0
  %202 = vmatpush1.bf16.msra.mxu0 %v169
  %203 = vmatprep.mubr.bf16.mxu0 %v159
  %204 = vmatmul.mubr.bf16.gmra.mrb[0].mxu0 %v56
  %v205 = vpop.f32.mrb[0].mxu0
  %v206 = vadd.f32 0.0, %v205
  %v207 = vpop.f32.mrb[0].mxu0
  %v208 = vpop.f32.mrb[0].mxu0
  %v209 = vadd.f32 0.0, %v208
  %v210 = vpop.f32.mrb[0].mxu0
  %211 = vmatprep.mubr.bf16.mxu0 %v162
  %212 = vmatmul.mubr.bf16.gmra.mrb[0].mxu0 %v58
  %v213 = vpop.f32.mrb[0].mxu0
  %v214 = vadd.f32 0.0, %v213
  %v215 = vpop.f32.mrb[0].mxu0
  %v216 = vpop.f32.mrb[0].mxu0
  %v217 = vpop.f32.mrb[0].mxu0
  %218 = vdwg.mxu0
  %s219 = scalar_lea.vmem %s0, 128
  %v220 = vld [vmem:[%s219] sm:$0xf]
  %v221 = vld [vmem:[%s219 + $0x4] sm:$0xf]
  %v222 = vld [vmem:[%s219 + $0x8] sm:$0xf]
  %v223 = vld [vmem:[%s219 + $0xc] sm:$0xf]
  %v224 = vld [vmem:[%s219 + $0x10] sm:$0xf]
  %v225 = vld [vmem:[%s219 + $0x14] sm:$0xf]
  %v226 = vld [vmem:[%s219 + $0x18] sm:$0xf]
  %v227 = vld [vmem:[%s219 + $0x1c] sm:$0xf]
  %v228 = vld [vmem:[%s219 + $0x20] sm:$0xf]
  %v229 = vld [vmem:[%s219 + $0x24] sm:$0xf]
  %v230 = vld [vmem:[%s219 + $0x28] sm:$0xf]
  %v231 = vld [vmem:[%s219 + $0x2c] sm:$0xf]
  %v232 = vld [vmem:[%s219 + $0x30] sm:$0xf]
  %v233 = vld [vmem:[%s219 + $0x34] sm:$0xf]
  %v234 = vld [vmem:[%s219 + $0x38] sm:$0xf]
  %v235 = vld [vmem:[%s219 + $0x3c] sm:$0xf]
  %v236 = vld [vmem:[%s219 + $0x40] sm:$0xf]
  %v237 = vld [vmem:[%s219 + $0x44] sm:$0xf]
  %v238 = vld [vmem:[%s219 + $0x48] sm:$0xf]
  %v239 = vld [vmem:[%s219 + $0x4c] sm:$0xf]
  %v240 = vld [vmem:[%s219 + $0x50] sm:$0xf]
  %v241 = vld [vmem:[%s219 + $0x54] sm:$0xf]
  %v242 = vld [vmem:[%s219 + $0x58] sm:$0xf]
  %v243 = vld [vmem:[%s219 + $0x5c] sm:$0xf]
  %v244 = vld [vmem:[%s219 + $0x60] sm:$0xf]
  %v245 = vld [vmem:[%s219 + $0x64] sm:$0xf]
  %v246 = vld [vmem:[%s219 + $0x68] sm:$0xf]
  %v247 = vld [vmem:[%s219 + $0x6c] sm:$0xf]
  %v248 = vld [vmem:[%s219 + $0x70] sm:$0xf]
  %v249 = vld [vmem:[%s219 + $0x74] sm:$0xf]
  %v250 = vld [vmem:[%s219 + $0x78] sm:$0xf]
  %v251 = vld [vmem:[%s219 + $0x7c] sm:$0x3]
  %v284 = vunpack.c.l.b16 %v220
  %v285 = vunpack.c.l.b16 %v221
  %v286 = vunpack.c.l.b16 %v222
  %v287 = vunpack.c.l.b16 %v223
  %v288 = vunpack.c.l.b16 %v224
  %v289 = vunpack.c.l.b16 %v225
  %v290 = vunpack.c.l.b16 %v226
  %v291 = vunpack.c.l.b16 %v227
  %v292 = vunpack.c.l.b16 %v228
  %v293 = vunpack.c.l.b16 %v229
  %v294 = vunpack.c.l.b16 %v230
  %v295 = vunpack.c.l.b16 %v231
  %v296 = vunpack.c.l.b16 %v232
  %v297 = vunpack.c.l.b16 %v233
  %v298 = vunpack.c.l.b16 %v234
  %v299 = vunpack.c.l.b16 %v235
  %v300 = vunpack.c.l.b16 %v236
  %v301 = vunpack.c.l.b16 %v237
  %v302 = vunpack.c.l.b16 %v238
  %v303 = vunpack.c.l.b16 %v239
  %v304 = vunpack.c.l.b16 %v240
  %v305 = vunpack.c.l.b16 %v241
  %v306 = vunpack.c.l.b16 %v242
  %v307 = vunpack.c.l.b16 %v243
  %v308 = vunpack.c.l.b16 %v244
  %v309 = vunpack.c.l.b16 %v245
  %v310 = vunpack.c.l.b16 %v246
  %v311 = vunpack.c.l.b16 %v247
  %v312 = vunpack.c.l.b16 %v248
  %v313 = vunpack.c.l.b16 %v249
  %v314 = vunpack.c.l.b16 %v250
  %v315 = vunpack.c.l.b16 %v251
  %v316 = vpack.c.b16 %v285, %v284
  %v317 = vpack.c.b16 %v287, %v286
  %v318 = vpack.c.b16 %v289, %v288
  %v319 = vpack.c.b16 %v291, %v290
  %v320 = vpack.c.b16 %v293, %v292
  %v321 = vpack.c.b16 %v295, %v294
  %v322 = vpack.c.b16 %v297, %v296
  %v323 = vpack.c.b16 %v299, %v298
  %v324 = vpack.c.b16 %v301, %v300
  %v325 = vpack.c.b16 %v303, %v302
  %v326 = vpack.c.b16 %v305, %v304
  %v327 = vpack.c.b16 %v307, %v306
  %v328 = vpack.c.b16 %v309, %v308
  %v329 = vpack.c.b16 %v311, %v310
  %v330 = vpack.c.b16 %v313, %v312
  %v331 = vpack.c.b16 %v315, %v314
  %v348 = vand.u32 %v331, %v167
  %350 = vmatprep.subr.bf16.mxu0 0
  %351 = vmatpush1.bf16.msra.mxu0 %v316
  %352 = vmatprep.subr.bf16.mxu0 0
  %353 = vmatpush1.bf16.msra.mxu0 %v317
  %354 = vmatprep.subr.bf16.mxu0 0
  %355 = vmatpush1.bf16.msra.mxu0 %v318
  %356 = vmatprep.subr.bf16.mxu0 0
  %357 = vmatpush1.bf16.msra.mxu0 %v319
  %358 = vmatprep.subr.bf16.mxu0 0
  %359 = vmatpush1.bf16.msra.mxu0 %v320
  %360 = vmatprep.subr.bf16.mxu0 0
  %361 = vmatpush1.bf16.msra.mxu0 %v321
  %362 = vmatprep.subr.bf16.mxu0 0
  %363 = vmatpush1.bf16.msra.mxu0 %v322
  %364 = vmatprep.subr.bf16.mxu0 0
  %365 = vmatpush1.bf16.msra.mxu0 %v323
  %366 = vmatprep.subr.bf16.mxu0 0
  %367 = vmatpush1.bf16.msra.mxu0 %v324
  %368 = vmatprep.subr.bf16.mxu0 0
  %369 = vmatpush1.bf16.msra.mxu0 %v325
  %370 = vmatprep.subr.bf16.mxu0 0
  %371 = vmatpush1.bf16.msra.mxu0 %v326
  %372 = vmatprep.subr.bf16.mxu0 0
  %373 = vmatpush1.bf16.msra.mxu0 %v327
  %374 = vmatprep.subr.bf16.mxu0 0
  %375 = vmatpush1.bf16.msra.mxu0 %v328
  %376 = vmatprep.subr.bf16.mxu0 0
  %377 = vmatpush1.bf16.msra.mxu0 %v329
  %378 = vmatprep.subr.bf16.mxu0 0
  %379 = vmatpush1.bf16.msra.mxu0 %v330
  %380 = vmatprep.subr.bf16.mxu0 0
  %381 = vmatpush1.bf16.msra.mxu0 %v348
  %382 = vmatprep.mubr.bf16.mxu0 %v159
  %383 = vmatmul.mubr.bf16.gmra.mrb[0].mxu0 %v56
  %v384 = vpop.f32.mrb[0].mxu0
  %v385 = vadd.f32 0.0, %v384
  %v386 = vpop.f32.mrb[0].mxu0
  %v387 = vpop.f32.mrb[0].mxu0
  %v388 = vadd.f32 0.0, %v387
  %v389 = vpop.f32.mrb[0].mxu0
  %390 = vmatprep.mubr.bf16.mxu0 %v162
  %391 = vmatmul.mubr.bf16.gmra.mrb[0].mxu0 %v58
  %v392 = vpop.f32.mrb[0].mxu0
  %v393 = vadd.f32 0.0, %v392
  %v394 = vpop.f32.mrb[0].mxu0
  %v395 = vpop.f32.mrb[0].mxu0
  %v396 = vpop.f32.mrb[0].mxu0
  %397 = vdwg.mxu0
  %s398 = scalar_lea.vmem %s0, 256
  %v399 = vld [vmem:[%s398] sm:$0xf]
  %v400 = vld [vmem:[%s398 + $0x4] sm:$0xf]
  %v401 = vld [vmem:[%s398 + $0x8] sm:$0xf]
  %v402 = vld [vmem:[%s398 + $0xc] sm:$0xf]
  %v403 = vld [vmem:[%s398 + $0x10] sm:$0xf]
  %v404 = vld [vmem:[%s398 + $0x14] sm:$0xf]
  %v405 = vld [vmem:[%s398 + $0x18] sm:$0xf]
  %v406 = vld [vmem:[%s398 + $0x1c] sm:$0xf]
  %v407 = vld [vmem:[%s398 + $0x20] sm:$0xf]
  %v408 = vld [vmem:[%s398 + $0x24] sm:$0xf]
  %v409 = vld [vmem:[%s398 + $0x28] sm:$0xf]
  %v410 = vld [vmem:[%s398 + $0x2c] sm:$0xf]
  %v411 = vld [vmem:[%s398 + $0x30] sm:$0xf]
  %v412 = vld [vmem:[%s398 + $0x34] sm:$0xf]
  %v413 = vld [vmem:[%s398 + $0x38] sm:$0xf]
  %v414 = vld [vmem:[%s398 + $0x3c] sm:$0xf]
  %v415 = vld [vmem:[%s398 + $0x40] sm:$0xf]
  %v416 = vld [vmem:[%s398 + $0x44] sm:$0xf]
  %v417 = vld [vmem:[%s398 + $0x48] sm:$0xf]
  %v418 = vld [vmem:[%s398 + $0x4c] sm:$0xf]
  %v419 = vld [vmem:[%s398 + $0x50] sm:$0xf]
  %v420 = vld [vmem:[%s398 + $0x54] sm:$0xf]
  %v421 = vld [vmem:[%s398 + $0x58] sm:$0xf]
  %v422 = vld [vmem:[%s398 + $0x5c] sm:$0xf]
  %v423 = vld [vmem:[%s398 + $0x60] sm:$0xf]
  %v424 = vld [vmem:[%s398 + $0x64] sm:$0xf]
  %v425 = vld [vmem:[%s398 + $0x68] sm:$0xf]
  %v426 = vld [vmem:[%s398 + $0x6c] sm:$0xf]
  %v427 = vld [vmem:[%s398 + $0x70] sm:$0xf]
  %v428 = vld [vmem:[%s398 + $0x74] sm:$0xf]
  %v429 = vld [vmem:[%s398 + $0x78] sm:$0xf]
  %v430 = vld [vmem:[%s398 + $0x7c] sm:$0x3]
  %v463 = vunpack.c.l.b16 %v399
  %v464 = vunpack.c.l.b16 %v400
  %v465 = vunpack.c.l.b16 %v401
  %v466 = vunpack.c.l.b16 %v402
  %v467 = vunpack.c.l.b16 %v403
  %v468 = vunpack.c.l.b16 %v404
  %v469 = vunpack.c.l.b16 %v405
  %v470 = vunpack.c.l.b16 %v406
  %v471 = vunpack.c.l.b16 %v407
  %v472 = vunpack.c.l.b16 %v408
  %v473 = vunpack.c.l.b16 %v409
  %v474 = vunpack.c.l.b16 %v410
  %v475 = vunpack.c.l.b16 %v411
  %v476 = vunpack.c.l.b16 %v412
  %v477 = vunpack.c.l.b16 %v413
  %v478 = vunpack.c.l.b16 %v414
  %v479 = vunpack.c.l.b16 %v415
  %v480 = vunpack.c.l.b16 %v416
  %v481 = vunpack.c.l.b16 %v417
  %v482 = vunpack.c.l.b16 %v418
  %v483 = vunpack.c.l.b16 %v419
  %v484 = vunpack.c.l.b16 %v420
  %v485 = vunpack.c.l.b16 %v421
  %v486 = vunpack.c.l.b16 %v422
  %v487 = vunpack.c.l.b16 %v423
  %v488 = vunpack.c.l.b16 %v424
  %v489 = vunpack.c.l.b16 %v425
  %v490 = vunpack.c.l.b16 %v426
  %v491 = vunpack.c.l.b16 %v427
  %v492 = vunpack.c.l.b16 %v428
  %v493 = vunpack.c.l.b16 %v429
  %v494 = vunpack.c.l.b16 %v430
  %v495 = vpack.c.b16 %v464, %v463
  %v496 = vpack.c.b16 %v466, %v465
  %v497 = vpack.c.b16 %v468, %v467
  %v498 = vpack.c.b16 %v470, %v469
  %v499 = vpack.c.b16 %v472, %v471
  %v500 = vpack.c.b16 %v474, %v473
  %v501 = vpack.c.b16 %v476, %v475
  %v502 = vpack.c.b16 %v478, %v477
  %v503 = vpack.c.b16 %v480, %v479
  %v504 = vpack.c.b16 %v482, %v481
  %v505 = vpack.c.b16 %v484, %v483
  %v506 = vpack.c.b16 %v486, %v485
  %v507 = vpack.c.b16 %v488, %v487
  %v508 = vpack.c.b16 %v490, %v489
  %v509 = vpack.c.b16 %v492, %v491
  %v510 = vpack.c.b16 %v494, %v493
  %v527 = vand.u32 %v510, %v167
  %529 = vmatprep.subr.bf16.mxu0 0
  %530 = vmatpush1.bf16.msra.mxu0 %v495
  %531 = vmatprep.subr.bf16.mxu0 0
  %532 = vmatpush1.bf16.msra.mxu0 %v496
  %533 = vmatprep.subr.bf16.mxu0 0
  %534 = vmatpush1.bf16.msra.mxu0 %v497
  %535 = vmatprep.subr.bf16.mxu0 0
  %536 = vmatpush1.bf16.msra.mxu0 %v498
  %537 = vmatprep.subr.bf16.mxu0 0
  %538 = vmatpush1.bf16.msra.mxu0 %v499
  %539 = vmatprep.subr.bf16.mxu0 0
  %540 = vmatpush1.bf16.msra.mxu0 %v500
  %541 = vmatprep.subr.bf16.mxu0 0
  %542 = vmatpush1.bf16.msra.mxu0 %v501
  %543 = vmatprep.subr.bf16.mxu0 0
  %544 = vmatpush1.bf16.msra.mxu0 %v502
  %545 = vmatprep.subr.bf16.mxu0 0
  %546 = vmatpush1.bf16.msra.mxu0 %v503
  %547 = vmatprep.subr.bf16.mxu0 0
  %548 = vmatpush1.bf16.msra.mxu0 %v504
  %549 = vmatprep.subr.bf16.mxu0 0
  %550 = vmatpush1.bf16.msra.mxu0 %v505
  %551 = vmatprep.subr.bf16.mxu0 0
  %552 = vmatpush1.bf16.msra.mxu0 %v506
  %553 = vmatprep.subr.bf16.mxu0 0
  %554 = vmatpush1.bf16.msra.mxu0 %v507
  %555 = vmatprep.subr.bf16.mxu0 0
  %556 = vmatpush1.bf16.msra.mxu0 %v508
  %557 = vmatprep.subr.bf16.mxu0 0
  %558 = vmatpush1.bf16.msra.mxu0 %v509
  %559 = vmatprep.subr.bf16.mxu0 0
  %560 = vmatpush1.bf16.msra.mxu0 %v527
  %561 = vmatprep.mubr.bf16.mxu0 %v159
  %562 = vmatmul.mubr.bf16.gmra.mrb[0].mxu0 %v56
  %v563 = vpop.f32.mrb[0].mxu0
  %v564 = vadd.f32 0.0, %v563
  %v565 = vpop.f32.mrb[0].mxu0
  %v566 = vpop.f32.mrb[0].mxu0
  %v567 = vadd.f32 0.0, %v566
  %v568 = vpop.f32.mrb[0].mxu0
  %569 = vmatprep.mubr.bf16.mxu0 %v162
  %570 = vmatmul.mubr.bf16.gmra.mrb[0].mxu0 %v58
  %v571 = vpop.f32.mrb[0].mxu0
  %v572 = vadd.f32 0.0, %v571
  %v573 = vpop.f32.mrb[0].mxu0
  %v574 = vpop.f32.mrb[0].mxu0
  %v575 = vpop.f32.mrb[0].mxu0
  %576 = vdwg.mxu0
  %s577 = scalar_lea.vmem %s0, 384
  %v578 = vld [vmem:[%s577] sm:$0xf]
  %v579 = vld [vmem:[%s577 + $0x4] sm:$0xf]
  %v580 = vld [vmem:[%s577 + $0x8] sm:$0xf]
  %v581 = vld [vmem:[%s577 + $0xc] sm:$0xf]
  %v582 = vld [vmem:[%s577 + $0x10] sm:$0xf]
  %v583 = vld [vmem:[%s577 + $0x14] sm:$0xf]
  %v584 = vld [vmem:[%s577 + $0x18] sm:$0xf]
  %v585 = vld [vmem:[%s577 + $0x1c] sm:$0xf]
  %v586 = vld [vmem:[%s577 + $0x20] sm:$0xf]
  %v587 = vld [vmem:[%s577 + $0x24] sm:$0xf]
  %v588 = vld [vmem:[%s577 + $0x28] sm:$0xf]
  %v589 = vld [vmem:[%s577 + $0x2c] sm:$0xf]
  %v590 = vld [vmem:[%s577 + $0x30] sm:$0xf]
  %v591 = vld [vmem:[%s577 + $0x34] sm:$0xf]
  %v592 = vld [vmem:[%s577 + $0x38] sm:$0xf]
  %v593 = vld [vmem:[%s577 + $0x3c] sm:$0xf]
  %v594 = vld [vmem:[%s577 + $0x40] sm:$0xf]
  %v595 = vld [vmem:[%s577 + $0x44] sm:$0xf]
  %v596 = vld [vmem:[%s577 + $0x48] sm:$0xf]
  %v597 = vld [vmem:[%s577 + $0x4c] sm:$0xf]
  %v598 = vld [vmem:[%s577 + $0x50] sm:$0xf]
  %v599 = vld [vmem:[%s577 + $0x54] sm:$0xf]
  %v600 = vld [vmem:[%s577 + $0x58] sm:$0xf]
  %v601 = vld [vmem:[%s577 + $0x5c] sm:$0xf]
  %v602 = vld [vmem:[%s577 + $0x60] sm:$0xf]
  %v603 = vld [vmem:[%s577 + $0x64] sm:$0xf]
  %v604 = vld [vmem:[%s577 + $0x68] sm:$0xf]
  %v605 = vld [vmem:[%s577 + $0x6c] sm:$0xf]
  %v606 = vld [vmem:[%s577 + $0x70] sm:$0xf]
  %v607 = vld [vmem:[%s577 + $0x74] sm:$0xf]
  %v608 = vld [vmem:[%s577 + $0x78] sm:$0xf]
  %v609 = vld [vmem:[%s577 + $0x7c] sm:$0x3]
  %v642 = vunpack.c.l.b16 %v578
  %v643 = vunpack.c.l.b16 %v579
  %v644 = vunpack.c.l.b16 %v580
  %v645 = vunpack.c.l.b16 %v581
  %v646 = vunpack.c.l.b16 %v582
  %v647 = vunpack.c.l.b16 %v583
  %v648 = vunpack.c.l.b16 %v584
  %v649 = vunpack.c.l.b16 %v585
  %v650 = vunpack.c.l.b16 %v586
  %v651 = vunpack.c.l.b16 %v587
  %v652 = vunpack.c.l.b16 %v588
  %v653 = vunpack.c.l.b16 %v589
  %v654 = vunpack.c.l.b16 %v590
  %v655 = vunpack.c.l.b16 %v591
  %v656 = vunpack.c.l.b16 %v592
  %v657 = vunpack.c.l.b16 %v593
  %v658 = vunpack.c.l.b16 %v594
  %v659 = vunpack.c.l.b16 %v595
  %v660 = vunpack.c.l.b16 %v596
  %v661 = vunpack.c.l.b16 %v597
  %v662 = vunpack.c.l.b16 %v598
  %v663 = vunpack.c.l.b16 %v599
  %v664 = vunpack.c.l.b16 %v600
  %v665 = vunpack.c.l.b16 %v601
  %v666 = vunpack.c.l.b16 %v602
  %v667 = vunpack.c.l.b16 %v603
  %v668 = vunpack.c.l.b16 %v604
  %v669 = vunpack.c.l.b16 %v605
  %v670 = vunpack.c.l.b16 %v606
  %v671 = vunpack.c.l.b16 %v607
  %v672 = vunpack.c.l.b16 %v608
  %v673 = vunpack.c.l.b16 %v609
  %v674 = vpack.c.b16 %v643, %v642
  %v675 = vpack.c.b16 %v645, %v644
  %v676 = vpack.c.b16 %v647, %v646
  %v677 = vpack.c.b16 %v649, %v648
  %v678 = vpack.c.b16 %v651, %v650
  %v679 = vpack.c.b16 %v653, %v652
  %v680 = vpack.c.b16 %v655, %v654
  %v681 = vpack.c.b16 %v657, %v656
  %v682 = vpack.c.b16 %v659, %v658
  %v683 = vpack.c.b16 %v661, %v660
  %v684 = vpack.c.b16 %v663, %v662
  %v685 = vpack.c.b16 %v665, %v664
  %v686 = vpack.c.b16 %v667, %v666
  %v687 = vpack.c.b16 %v669, %v668
  %v688 = vpack.c.b16 %v671, %v670
  %v689 = vpack.c.b16 %v673, %v672
  %v706 = vand.u32 %v689, %v167
  %708 = vmatprep.subr.bf16.mxu0 0
  %709 = vmatpush1.bf16.msra.mxu0 %v674
  %710 = vmatprep.subr.bf16.mxu0 0
  %711 = vmatpush1.bf16.msra.mxu0 %v675
  %712 = vmatprep.subr.bf16.mxu0 0
  %713 = vmatpush1.bf16.msra.mxu0 %v676
  %714 = vmatprep.subr.bf16.mxu0 0
  %715 = vmatpush1.bf16.msra.mxu0 %v677
  %716 = vmatprep.subr.bf16.mxu0 0
  %717 = vmatpush1.bf16.msra.mxu0 %v678
  %718 = vmatprep.subr.bf16.mxu0 0
  %719 = vmatpush1.bf16.msra.mxu0 %v679
  %720 = vmatprep.subr.bf16.mxu0 0
  %721 = vmatpush1.bf16.msra.mxu0 %v680
  %722 = vmatprep.subr.bf16.mxu0 0
  %723 = vmatpush1.bf16.msra.mxu0 %v681
  %724 = vmatprep.subr.bf16.mxu0 0
  %725 = vmatpush1.bf16.msra.mxu0 %v682
  %726 = vmatprep.subr.bf16.mxu0 0
  %727 = vmatpush1.bf16.msra.mxu0 %v683
  %728 = vmatprep.subr.bf16.mxu0 0
  %729 = vmatpush1.bf16.msra.mxu0 %v684
  %730 = vmatprep.subr.bf16.mxu0 0
  %731 = vmatpush1.bf16.msra.mxu0 %v685
  %732 = vmatprep.subr.bf16.mxu0 0
  %733 = vmatpush1.bf16.msra.mxu0 %v686
  %734 = vmatprep.subr.bf16.mxu0 0
  %735 = vmatpush1.bf16.msra.mxu0 %v687
  %736 = vmatprep.subr.bf16.mxu0 0
  %737 = vmatpush1.bf16.msra.mxu0 %v688
  %738 = vmatprep.subr.bf16.mxu0 0
  %739 = vmatpush1.bf16.msra.mxu0 %v706
  %740 = vmatprep.mubr.bf16.mxu0 %v159
  %741 = vmatmul.mubr.bf16.gmra.mrb[0].mxu0 %v56
  %v742 = vpop.f32.mrb[0].mxu0
  %v743 = vadd.f32 0.0, %v742
  %v744 = vpop.f32.mrb[0].mxu0
  %v745 = vpop.f32.mrb[0].mxu0
  %v746 = vadd.f32 0.0, %v745
  %v747 = vpop.f32.mrb[0].mxu0
  %748 = vmatprep.mubr.bf16.mxu0 %v162
  %749 = vmatmul.mubr.bf16.gmra.mrb[0].mxu0 %v58
  %v750 = vpop.f32.mrb[0].mxu0
  %v751 = vadd.f32 0.0, %v750
  %v752 = vpop.f32.mrb[0].mxu0
  %v753 = vpop.f32.mrb[0].mxu0
  %v754 = vpop.f32.mrb[0].mxu0
  %755 = vdwg.mxu0
  %v756 = vmax.f32 %v206, %v385
  %v757 = vmax.f32 %v209, %v388
  %v758 = vmax.f32 %v214, %v393
  %v759 = vmax.f32 %v564, %v743
  %v760 = vmax.f32 %v567, %v746
  %v761 = vmax.f32 %v572, %v751
  %v762 = vmax.f32 %v756, %v759
  %v763 = vmax.f32 %v757, %v760
  %v764 = vmax.f32 %v758, %v761
  %v765 = vmax.f32 %v762, 0.0
  %v766 = vmax.f32 %v763, 0.0
  %v767 = vmax.f32 %v764, 0.0
  %v768 = vpack.c.bf16 %v766, %v765
  %v769 = vpack.c.bf16 %v767, %v767
  %v772 = vunpack.c.l.b16 %v768
  %v773 = vunpack.c.h.b16 %v768
  %v774 = vunpack.c.l.b16 %v769
  %v775 = vpack.c.b16 %v772, %v772
  %v776 = vpack.c.b16 %v773, %v773
  %v777 = vpack.c.b16 %v774, %v774
  %781 = vst [vmem:[%s2] sm:$0xf] %v775
  %782 = vst [vmem:[%s2 + $0x4] sm:$0xf] %v776
  %783 = vst [vmem:[%s2 + $0x8] sm:$0x3] %v777
  // Predicated region
  $region10: #{net1_forward.4} parent=0 // pred_check
    _
  $region11: #{net1_forward.4} parent=0 // pred_check_branch
    %785 = sbr.rel (0) target = $region13
  $region12: #{net1_forward.4} parent=0 // pred_region
    _
  $region13: #{net1_forward.4} parent=0 // pred_fallthru
    _
  // Predicated region
  $region14: #{net1_forward.4} parent=0 // pred_check
    _
  $region15: #{net1_forward.4} parent=0 // pred_check_branch
    %787 = sbr.rel (0) target = $region17
  $region16: #{net1_forward.4} parent=0 // pred_region
    _
  $region17: #{net1_forward.4} parent=0 // pred_fallthru
    _

// kernel: net1_forward.5
$region0: #{net1_forward.5}
  #allocation0 [shape = 'u32[]', space=smem, size = 0x4, offset = 0x4, fixed_abs, tag = 'smem constant byte address 0x4 - core index']
  #allocation1 [shape = 'u32[144,128]{1,0:T(1,128)}', space=vmem, size = 0x12000, scoped, tag = 'internal scratch']
  %s0 = inlined_call_operand.vmem [shape: bf16[321,128], index: 0, kind: input, shape index: {}]
  %s1 = inlined_call_operand.vmem [shape: bf16[50,321], index: 1, kind: input, shape index: {}]
  %s2 = inlined_call_operand.vmem [shape: bf16[10,51], index: 2, kind: input, shape index: {}]
  %s3 = inlined_call_operand.vmem [shape: f32[10,128], index: 3, kind: output, shape index: {}]
  %s4 = sld [smem:[#allocation0]]
  $region22: #{net1_forward.5} parent=0
    _
  %s6 = ssub.s32 1, %s4
  %s7 = scalar_select 0, %s6, %s4
  // Predicated region
  $region2: #{net1_forward.5} parent=0 // pred_check
    _
  $region3: #{net1_forward.5} parent=0 // pred_check_branch
    %9 = sbr.rel (0) target = $region5
  $region4: #{net1_forward.5} parent=0 // pred_region
    _
  $region5: #{net1_forward.5} parent=0 // pred_fallthru
    _
  // Predicated region
  $region6: #{net1_forward.5} parent=0 // pred_check
    _
  $region7: #{net1_forward.5} parent=0 // pred_check_branch
    %11 = sbr.rel (0) target = $region9
  $region8: #{net1_forward.5} parent=0 // pred_region
    _
  $region9: #{net1_forward.5} parent=0 // pred_fallthru
    _
  // Predicated region
  $region10: #{net1_forward.5} parent=0 // pred_check
    _
  $region11: #{net1_forward.5} parent=0 // pred_check_branch
    %13 = sbr.rel (0) target = $region13
  $region12: #{net1_forward.5} parent=0 // pred_region
    _
  $region13: #{net1_forward.5} parent=0 // pred_fallthru
    _
  %v15 = vld [vmem:[%s1] sm:$0xff]
  %v16 = vld [vmem:[%s1 + $0x8] sm:$0xf]
  %v17 = vld [vmem:[%s1 + $0xc] sm:$0xff]
  %v18 = vld [vmem:[%s1 + $0x14] sm:$0xf]
  %v19 = vld [vmem:[%s1 + $0x18] sm:$0xff]
  %v20 = vld [vmem:[%s1 + $0x20] sm:$0xf]
  %v21 = vld [vmem:[%s1 + $0x24] sm:$0xff]
  %v22 = vld [vmem:[%s1 + $0x2c] sm:$0xf]
  %v23 = vld [vmem:[%s1 + $0x30] sm:$0xff]
  %v24 = vld [vmem:[%s1 + $0x38] sm:$0xf]
  %v25 = vld [vmem:[%s1 + $0x3c] sm:$0xff]
  %v26 = vld [vmem:[%s1 + $0x44] sm:$0xf]
  %v27 = vld [vmem:[%s1 + $0x48] sm:$0x11]
  %v28 = vld [vmem:[%s1 + $0x50] sm:$0x1]
  %v29 = vld [vmem:[%s0] sm:$0xf]
  %v30 = vld [vmem:[%s0 + $0x4] sm:$0xf]
  %v31 = vld [vmem:[%s0 + $0x8] sm:$0xf]
  %v32 = vld [vmem:[%s0 + $0xc] sm:$0xf]
  %v33 = vld [vmem:[%s0 + $0x10] sm:$0xf]
  %v34 = vld [vmem:[%s0 + $0x14] sm:$0xf]
  %v35 = vld [vmem:[%s0 + $0x18] sm:$0xf]
  %v36 = vld [vmem:[%s0 + $0x1c] sm:$0xf]
  %v37 = vld [vmem:[%s0 + $0x20] sm:$0xf]
  %v38 = vld [vmem:[%s0 + $0x24] sm:$0xf]
  %v39 = vld [vmem:[%s0 + $0x28] sm:$0xf]
  %v40 = vld [vmem:[%s0 + $0x2c] sm:$0xf]
  %v41 = vld [vmem:[%s0 + $0x30] sm:$0xf]
  %v42 = vld [vmem:[%s0 + $0x34] sm:$0xf]
  %v43 = vld [vmem:[%s0 + $0x38] sm:$0xf]
  %v44 = vld [vmem:[%s0 + $0x3c] sm:$0xf]
  %v45 = vld [vmem:[%s0 + $0x40] sm:$0xf]
  %v46 = vld [vmem:[%s0 + $0x44] sm:$0xf]
  %v47 = vld [vmem:[%s0 + $0x48] sm:$0xf]
  %v48 = vld [vmem:[%s0 + $0x4c] sm:$0xf]
  %v49 = vld [vmem:[%s0 + $0x50] sm:$0xf]
  %v50 = vld [vmem:[%s0 + $0x54] sm:$0xf]
  %v51 = vld [vmem:[%s0 + $0x58] sm:$0xf]
  %v52 = vld [vmem:[%s0 + $0x5c] sm:$0xf]
  %v53 = vld [vmem:[%s0 + $0x60] sm:$0xf]
  %v54 = vld [vmem:[%s0 + $0x64] sm:$0xf]
  %v55 = vld [vmem:[%s0 + $0x68] sm:$0xf]
  %v56 = vld [vmem:[%s0 + $0x6c] sm:$0xf]
  %v57 = vld [vmem:[%s0 + $0x70] sm:$0xf]
  %v58 = vld [vmem:[%s0 + $0x74] sm:$0xf]
  %v59 = vld [vmem:[%s0 + $0x78] sm:$0xf]
  %v60 = vld [vmem:[%s0 + $0x7c] sm:$0xf]
  %v61 = vld [vmem:[%s0 + $0x80] sm:$0xf]
  %v62 = vld [vmem:[%s0 + $0x84] sm:$0xf]
  %v63 = vld [vmem:[%s0 + $0x88] sm:$0xf]
  %v64 = vld [vmem:[%s0 + $0x8c] sm:$0xf]
  %v65 = vld [vmem:[%s0 + $0x90] sm:$0xf]
  %v66 = vld [vmem:[%s0 + $0x94] sm:$0xf]
  %v67 = vld [vmem:[%s0 + $0x98] sm:$0xf]
  %v68 = vld [vmem:[%s0 + $0x9c] sm:$0xf]
  %v69 = vld [vmem:[%s0 + $0xa0] sm:$0x1]
  %v84 = vunpack.c.l.b16 %v15
  %v85 = vunpack.c.h.b16 %v15
  %v86 = vunpack.c.l.b16 %v16
  %v87 = vunpack.c.l.b16 %v17
  %v88 = vunpack.c.h.b16 %v17
  %v89 = vunpack.c.l.b16 %v18
  %v90 = vunpack.c.l.b16 %v19
  %v91 = vunpack.c.h.b16 %v19
  %v92 = vunpack.c.l.b16 %v20
  %v93 = vunpack.c.l.b16 %v21
  %v94 = vunpack.c.h.b16 %v21
  %v95 = vunpack.c.l.b16 %v22
  %v96 = vunpack.c.l.b16 %v23
  %v97 = vunpack.c.h.b16 %v23
  %v98 = vunpack.c.l.b16 %v24
  %v99 = vunpack.c.l.b16 %v25
  %v100 = vunpack.c.h.b16 %v25
  %v101 = vunpack.c.l.b16 %v26
  %v102 = vunpack.c.l.b16 %v27
  %v103 = vunpack.c.h.b16 %v27
  %v104 = vunpack.c.l.b16 %v28
  %v105 = vpack.c.b16 %v87, %v84
  %v106 = vpack.c.b16 %v88, %v85
  %v107 = vpack.c.b16 %v89, %v86
  %v108 = vpack.c.b16 %v93, %v90
  %v109 = vpack.c.b16 %v94, %v91
  %v110 = vpack.c.b16 %v95, %v92
  %v111 = vpack.c.b16 %v99, %v96
  %v112 = vpack.c.b16 %v100, %v97
  %v113 = vpack.c.b16 %v101, %v98
  %v114 = vpack.c.b16 %v102, %v102
  %v115 = vpack.c.b16 %v103, %v103
  %v116 = vpack.c.b16 %v104, %v104
  %v166 = vunpack.c.l.b16 %v29
  %v167 = vunpack.c.l.b16 %v30
  %v168 = vunpack.c.l.b16 %v31
  %v169 = vunpack.c.l.b16 %v32
  %v170 = vunpack.c.l.b16 %v33
  %v171 = vunpack.c.l.b16 %v34
  %v172 = vunpack.c.l.b16 %v35
  %v173 = vunpack.c.l.b16 %v36
  %v174 = vunpack.c.l.b16 %v37
  %v175 = vunpack.c.l.b16 %v38
  %v176 = vunpack.c.l.b16 %v39
  %v177 = vunpack.c.l.b16 %v40
  %v178 = vunpack.c.l.b16 %v41
  %v179 = vunpack.c.l.b16 %v42
  %v180 = vunpack.c.l.b16 %v43
  %v181 = vunpack.c.l.b16 %v44
  %v182 = vunpack.c.l.b16 %v45
  %v183 = vunpack.c.l.b16 %v46
  %v184 = vunpack.c.l.b16 %v47
  %v185 = vunpack.c.l.b16 %v48
  %v186 = vunpack.c.l.b16 %v49
  %v187 = vunpack.c.l.b16 %v50
  %v188 = vunpack.c.l.b16 %v51
  %v189 = vunpack.c.l.b16 %v52
  %v190 = vunpack.c.l.b16 %v53
  %v191 = vunpack.c.l.b16 %v54
  %v192 = vunpack.c.l.b16 %v55
  %v193 = vunpack.c.l.b16 %v56
  %v194 = vunpack.c.l.b16 %v57
  %v195 = vunpack.c.l.b16 %v58
  %v196 = vunpack.c.l.b16 %v59
  %v197 = vunpack.c.l.b16 %v60
  %v198 = vunpack.c.l.b16 %v61
  %v199 = vunpack.c.l.b16 %v62
  %v200 = vunpack.c.l.b16 %v63
  %v201 = vunpack.c.l.b16 %v64
  %v202 = vunpack.c.l.b16 %v65
  %v203 = vunpack.c.l.b16 %v66
  %v204 = vunpack.c.l.b16 %v67
  %v205 = vunpack.c.l.b16 %v68
  %v206 = vunpack.c.l.b16 %v69
  %v207 = vpack.c.b16 %v167, %v166
  %v208 = vpack.c.b16 %v169, %v168
  %v209 = vpack.c.b16 %v171, %v170
  %v210 = vpack.c.b16 %v173, %v172
  %v211 = vpack.c.b16 %v175, %v174
  %v212 = vpack.c.b16 %v177, %v176
  %v213 = vpack.c.b16 %v179, %v178
  %v214 = vpack.c.b16 %v181, %v180
  %v215 = vpack.c.b16 %v183, %v182
  %v216 = vpack.c.b16 %v185, %v184
  %v217 = vpack.c.b16 %v187, %v186
  %v218 = vpack.c.b16 %v189, %v188
  %v219 = vpack.c.b16 %v191, %v190
  %v220 = vpack.c.b16 %v193, %v192
  %v221 = vpack.c.b16 %v195, %v194
  %v222 = vpack.c.b16 %v197, %v196
  %v223 = vpack.c.b16 %v199, %v198
  %v224 = vpack.c.b16 %v201, %v200
  %v225 = vpack.c.b16 %v203, %v202
  %v226 = vpack.c.b16 %v205, %v204
  %v227 = vpack.c.b16 %v206, %v206
  %vm248 = vcmask 531456
  %v250 = vsel %vm248, %v107, 0
  %v253 = vsel %vm248, %v110, 0
  %v256 = vsel %vm248, %v113, 0
  %v259 = vsel %vm248, %v116, 0
  %vm261 = vcmask 1040384
  %v262 = vsel 0, 4294967295, 65535
  %v263 = vsel %vm261, %v262, 0
  %v265 = vand.u32 %v227, %v263
  %267 = vmatprep.subr.bf16.mxu0 0
  %268 = vmatpush1.bf16.msra.mxu0 %v207
  %269 = vmatprep.subr.bf16.mxu0 0
  %270 = vmatpush1.bf16.msra.mxu0 %v208
  %271 = vmatprep.subr.bf16.mxu0 0
  %272 = vmatpush1.bf16.msra.mxu0 %v209
  %273 = vmatprep.subr.bf16.mxu0 0
  %274 = vmatpush1.bf16.msra.mxu0 %v210
  %275 = vmatprep.subr.bf16.mxu0 0
  %276 = vmatpush1.bf16.msra.mxu0 %v211
  %277 = vmatprep.subr.bf16.mxu0 0
  %278 = vmatpush1.bf16.msra.mxu0 %v212
  %279 = vmatprep.subr.bf16.mxu0 0
  %280 = vmatpush1.bf16.msra.mxu0 %v213
  %281 = vmatprep.subr.bf16.mxu0 0
  %282 = vmatpush1.bf16.msra.mxu0 %v214
  %283 = vmatprep.subr.bf16.mxu0 0
  %284 = vmatpush1.bf16.msra.mxu0 %v215
  %285 = vmatprep.subr.bf16.mxu0 0
  %286 = vmatpush1.bf16.msra.mxu0 %v216
  %287 = vmatprep.subr.bf16.mxu0 0
  %288 = vmatpush1.bf16.msra.mxu0 %v217
  %289 = vmatprep.subr.bf16.mxu0 0
  %290 = vmatpush1.bf16.msra.mxu0 %v218
  %291 = vmatprep.subr.bf16.mxu0 0
  %292 = vmatpush1.bf16.msra.mxu0 %v219
  %293 = vmatprep.subr.bf16.mxu0 0
  %294 = vmatpush1.bf16.msra.mxu0 %v220
  %295 = vmatprep.subr.bf16.mxu0 0
  %296 = vmatpush1.bf16.msra.mxu0 %v221
  %297 = vmatprep.subr.bf16.mxu0 0
  %298 = vmatpush1.bf16.msra.mxu0 %v222
  %299 = vmatprep.mubr.bf16.mxu0 %v106
  %300 = vmatmul.mubr.bf16.gmra.mrb[0].mxu0 %v105
  %v301 = vpop.f32.mrb[0].mxu0
  %v302 = vadd.f32 0.0, %v301
  %v303 = vpop.f32.mrb[0].mxu0
  %v304 = vpop.f32.mrb[0].mxu0
  %v305 = vadd.f32 0.0, %v304
  %v306 = vpop.f32.mrb[0].mxu0
  %307 = vmatprep.mubr.bf16.mxu0 %v109
  %308 = vmatmul.mubr.bf16.gmra.mrb[0].mxu0 %v108
  %v309 = vpop.f32.mrb[0].mxu0
  %v310 = vadd.f32 0.0, %v309
  %v311 = vpop.f32.mrb[0].mxu0
  %v312 = vpop.f32.mrb[0].mxu0
  %v313 = vadd.f32 0.0, %v312
  %v314 = vpop.f32.mrb[0].mxu0
  %315 = vmatprep.mubr.bf16.mxu0 %v112
  %316 = vmatmul.mubr.bf16.gmra.mrb[0].mxu0 %v111
  %v317 = vpop.f32.mrb[0].mxu0
  %v318 = vadd.f32 0.0, %v317
  %v319 = vpop.f32.mrb[0].mxu0
  %v320 = vpop.f32.mrb[0].mxu0
  %v321 = vadd.f32 0.0, %v320
  %v322 = vpop.f32.mrb[0].mxu0
  %323 = vmatprep.mubr.bf16.mxu0 %v115
  %324 = vmatmul.mubr.bf16.gmra.mrb[0].mxu0 %v114
  %v325 = vpop.f32.mrb[0].mxu0
  %v326 = vadd.f32 0.0, %v325
  %v327 = vpop.f32.mrb[0].mxu0
  %v328 = vpop.f32.mrb[0].mxu0
  %v329 = vpop.f32.mrb[0].mxu0
  %330 = vdwg.mxu0
  %331 = vmatprep.subr.bf16.mxu0 0
  %332 = vmatpush1.bf16.msra.mxu0 %v223
  %333 = vmatprep.subr.bf16.mxu0 0
  %334 = vmatpush1.bf16.msra.mxu0 %v224
  %335 = vmatprep.subr.bf16.mxu0 0
  %336 = vmatpush1.bf16.msra.mxu0 %v225
  %337 = vmatprep.subr.bf16.mxu0 0
  %338 = vmatpush1.bf16.msra.mxu0 %v226
  %339 = vmatprep.subr.bf16.mxu0 0
  %340 = vmatpush1.bf16.msra.mxu0 %v265
  %341 = vmatprep.subr.bf16.mxu0 0
  %342 = vmatpush1.bf16.msra.mxu0 0
  %343 = vmatprep.subr.bf16.mxu0 0
  %344 = vmatpush1.bf16.msra.mxu0 0
  %345 = vmatprep.subr.bf16.mxu0 0
  %346 = vmatpush1.bf16.msra.mxu0 0
  %347 = vmatprep.subr.bf16.mxu0 0
  %348 = vmatpush1.bf16.msra.mxu0 0
  %349 = vmatprep.subr.bf16.mxu0 0
  %350 = vmatpush1.bf16.msra.mxu0 0
  %351 = vmatprep.subr.bf16.mxu0 0
  %352 = vmatpush1.bf16.msra.mxu0 0
  %353 = vmatprep.subr.bf16.mxu0 0
  %354 = vmatpush1.bf16.msra.mxu0 0
  %355 = vmatprep.subr.bf16.mxu0 0
  %356 = vmatpush1.bf16.msra.mxu0 0
  %357 = vmatprep.subr.bf16.mxu0 0
  %358 = vmatpush1.bf16.msra.mxu0 0
  %359 = vmatprep.subr.bf16.mxu0 0
  %360 = vmatpush1.bf16.msra.mxu0 0
  %361 = vmatprep.subr.bf16.mxu0 0
  %362 = vmatpush1.bf16.msra.mxu0 0
  %363 = vmatprep.mubr.bf16.mxu0 0
  %364 = vmatmul.mubr.bf16.gmra.mrb[0].mxu0 %v250
  %v365 = vpop.f32.mrb[0].mxu0
  %v366 = vadd.f32 %v302, %v365
  %v367 = vpop.f32.mrb[0].mxu0
  %v368 = vpop.f32.mrb[0].mxu0
  %v369 = vadd.f32 %v305, %v368
  %v370 = vpop.f32.mrb[0].mxu0
  %371 = vmatprep.mubr.bf16.mxu0 0
  %372 = vmatmul.mubr.bf16.gmra.mrb[0].mxu0 %v253
  %v373 = vpop.f32.mrb[0].mxu0
  %v374 = vadd.f32 %v310, %v373
  %v375 = vpop.f32.mrb[0].mxu0
  %v376 = vpop.f32.mrb[0].mxu0
  %v377 = vadd.f32 %v313, %v376
  %v378 = vpop.f32.mrb[0].mxu0
  %379 = vmatprep.mubr.bf16.mxu0 0
  %380 = vmatmul.mubr.bf16.gmra.mrb[0].mxu0 %v256
  %v381 = vpop.f32.mrb[0].mxu0
  %v382 = vadd.f32 %v318, %v381
  %v383 = vpop.f32.mrb[0].mxu0
  %v384 = vpop.f32.mrb[0].mxu0
  %v385 = vadd.f32 %v321, %v384
  %v386 = vpop.f32.mrb[0].mxu0
  %387 = vmatprep.mubr.bf16.mxu0 0
  %388 = vmatmul.mubr.bf16.gmra.mrb[0].mxu0 %v259
  %v389 = vpop.f32.mrb[0].mxu0
  %v390 = vadd.f32 %v326, %v389
  %v391 = vpop.f32.mrb[0].mxu0
  %v392 = vpop.f32.mrb[0].mxu0
  %v393 = vpop.f32.mrb[0].mxu0
  %394 = vdwg.mxu0
  %v395 = vmax.f32 %v366, 0.0
  %v396 = vmax.f32 %v369, 0.0
  %v397 = vmax.f32 %v374, 0.0
  %v398 = vmax.f32 %v377, 0.0
  %v399 = vmax.f32 %v382, 0.0
  %v400 = vmax.f32 %v385, 0.0
  %v401 = vmax.f32 %v390, 0.0
  %v402 = vpack.c.bf16 %v396, %v395
  %v403 = vpack.c.bf16 %v398, %v397
  %v404 = vpack.c.bf16 %v400, %v399
  %v405 = vpack.c.bf16 %v401, %v401
  %v406 = vld [vmem:[%s2] sm:$0xf]
  %v407 = vld [vmem:[%s2 + $0x4] sm:$0x1]
  %v408 = vunpack.c.l.bf16 %v406
  %v409 = vunpack.c.l.bf16 %v407
  %411 = vset.pattern.permute.xlu0 50
  %412 = vperm.xlu0 %411, %v408
  %v413 = vpop.permute.xlu0 %412
  %416 = vset.pattern.permute.xlu0 50
  %417 = vperm.xlu0 %416, %v409
  %v418 = vpop.permute.xlu0 %417
  %v422 = vunpack.c.l.b16 %v406
  %v423 = vunpack.c.l.b16 %v407
  %v424 = vpack.c.b16 %v423, %v422
  %vm425 = vcmask 408576
  %v427 = vsel %vm425, %v424, 0
  %v430 = vsel %vm261, %v405, 0
  %432 = vmatprep.subr.bf16.mxu0 0
  %433 = vmatpush1.bf16.msra.mxu0 %v402
  %434 = vmatprep.subr.bf16.mxu0 0
  %435 = vmatpush1.bf16.msra.mxu0 %v403
  %436 = vmatprep.subr.bf16.mxu0 0
  %437 = vmatpush1.bf16.msra.mxu0 %v404
  %438 = vmatprep.subr.bf16.mxu0 0
  %439 = vmatpush1.bf16.msra.mxu0 %v430
  %440 = vmatprep.subr.bf16.mxu0 0
  %441 = vmatpush1.bf16.msra.mxu0 0
  %442 = vmatprep.subr.bf16.mxu0 0
  %443 = vmatpush1.bf16.msra.mxu0 0
  %444 = vmatprep.subr.bf16.mxu0 0
  %445 = vmatpush1.bf16.msra.mxu0 0
  %446 = vmatprep.subr.bf16.mxu0 0
  %447 = vmatpush1.bf16.msra.mxu0 0
  %448 = vmatprep.subr.bf16.mxu0 0
  %449 = vmatpush1.bf16.msra.mxu0 0
  %450 = vmatprep.subr.bf16.mxu0 0
  %451 = vmatpush1.bf16.msra.mxu0 0
  %452 = vmatprep.subr.bf16.mxu0 0
  %453 = vmatpush1.bf16.msra.mxu0 0
  %454 = vmatprep.subr.bf16.mxu0 0
  %455 = vmatpush1.bf16.msra.mxu0 0
  %456 = vmatprep.subr.bf16.mxu0 0
  %457 = vmatpush1.bf16.msra.mxu0 0
  %458 = vmatprep.subr.bf16.mxu0 0
  %459 = vmatpush1.bf16.msra.mxu0 0
  %460 = vmatprep.subr.bf16.mxu0 0
  %461 = vmatpush1.bf16.msra.mxu0 0
  %462 = vmatprep.subr.bf16.mxu0 0
  %463 = vmatpush1.bf16.msra.mxu0 0
  %464 = vmatprep.mubr.bf16.mxu0 0
  %465 = vmatmul.mubr.bf16.gmra.mrb[0].mxu0 %v427
  %v466 = vpop.f32.mrb[0].mxu0
  %v467 = vadd.f32 %v413, %v466
  %v468 = vpop.f32.mrb[0].mxu0
  %v469 = vpop.f32.mrb[0].mxu0
  %v470 = vadd.f32 %v418, %v469
  %v471 = vpop.f32.mrb[0].mxu0
  %472 = vdwg.mxu0
  %vm473 = vcmask 1041408
  %v474 = vsel %vm473, %v470, -inf
  %v475 = vmax.f32 %v467, %v474
  %v476 = vrot.slane %v475, 4
  %v477 = vmax.f32 %v475, %v476
  %v478 = vrot.slane %v477, 2
  %v479 = vmax.f32 %v477, %v478
  %v480 = vrot.slane %v479, 1
  %v481 = vmax.f32 %v479, %v480
  %v482 = vsub.f32 %v467, %v481
  %v483 = vsub.f32 %v470, %v481
  %v484 = vmul.f32 %v482, 1.442695
  %v485 = vpow.pop %v484
  %v486 = vmul.f32 %v483, 1.442695
  %v487 = vpow.pop %v486
  %v488 = vsel %vm473, %v487, 0.0
  %v489 = vadd.f32 %v485, %v488
  %v490 = vrot.slane %v489, 4
  %v491 = vadd.f32 %v489, %v490
  %v492 = vrot.slane %v491, 2
  %v493 = vadd.f32 %v491, %v492
  %v494 = vrot.slane %v493, 1
  %v495 = vadd.f32 %v493, %v494
  %v496 = vlog2.pop %v495
  %v497 = vmul.f32 %v496, 0.6931472
  %v498 = vsub.f32 %v482, %v497
  %v499 = vsub.f32 %v483, %v497
  %500 = vst [vmem:[%s3] sm:$0xff] %v498
  %501 = vst [vmem:[%s3 + $0x8] sm:$0x3] %v499
  // Predicated region
  $region14: #{net1_forward.5} parent=0 // pred_check
    _
  $region15: #{net1_forward.5} parent=0 // pred_check_branch
    %503 = sbr.rel (0) target = $region17
  $region16: #{net1_forward.5} parent=0 // pred_region
    _
  $region17: #{net1_forward.5} parent=0 // pred_fallthru
    _
  // Predicated region
  $region18: #{net1_forward.5} parent=0 // pred_check
    _
  $region19: #{net1_forward.5} parent=0 // pred_check_branch
    %505 = sbr.rel (0) target = $region21
  $region20: #{net1_forward.5} parent=0 // pred_region
    _
  $region21: #{net1_forward.5} parent=0 // pred_fallthru
    _

</llo_original>
